<compile_context>
chip_gen: v5e
topology: v5e:2x2
jax: 0.10.0
libtpu: 0.0.40
codegen_flags: <defaults>
</compile_context>

<pallas_src>
import functools
import math

import jax
import jax.numpy as jnp
from jax import lax
from jax.experimental import pallas as pl
from jax.experimental.pallas import tpu as pltpu


_HIDDEN = 512  # fixed by the module definition


def _gelu_exact(x):
    # nn.GELU() default = exact erf-based GELU (bit-parity with PyTorch).
    return 0.5 * x * (1.0 + lax.erf(x * (1.0 / math.sqrt(2.0))))


def _encoder_kernel(x_ref, w1_ref, b1_ref, w2_ref, b2_ref, w3_ref, b3_ref, o_ref,
                    *, approximate_gelu):
    mm_dtype = w1_ref.dtype  # matmul input dtype (bf16 fast path / f32 parity path)

    if approximate_gelu:
        # tanh-approximate GELU on mm_dtype values: transcendental goes to the EUP slot,
        # polynomial runs on the bf16 VPU (v6e/v7x), and the result is already in the
        # matmul dtype for the next MXU op.
        def act(v):
            return jax.nn.gelu(v.astype(mm_dtype), approximate=True)
    else:
        # Exact erf GELU in f32 (PyTorch bit-parity path).
        def act(v):
            return _gelu_exact(v).astype(mm_dtype)

    x = x_ref[...].astype(mm_dtype)

    # common_fc
    h = jnp.dot(x, w1_ref[...], preferred_element_type=jnp.float32) + b1_ref[...]
    # feature_extractor = GELU -> Linear(512, 512) -> GELU
    h = act(h)
    h = jnp.dot(h, w2_ref[...], preferred_element_type=jnp.float32) + b2_ref[...]
    h = act(h)
    # latent_fc (output columns zero-padded to 128 lanes; zero cols don't change the norm)
    z = jnp.dot(h, w3_ref[...], preferred_element_type=jnp.float32) + b3_ref[...]

    # F.normalize(z, dim=-1) == z * rsqrt(max(sum(z^2), eps^2))   (rsqrt on the EUP)
    sumsq = jnp.sum(z * z, axis=-1, keepdims=True)
    inv = lax.rsqrt(jnp.maximum(sumsq, 1e-24))
    o_ref[...] = (z * inv).astype(o_ref.dtype)


def _round_up(n, m):
    return ((n + m - 1) // m) * m


def _infer_num_tensorcores():
    """Best-effort TensorCore-per-chip count (v7x: 2, v5e/v6e: 1).  Defaults to 1."""
    try:
        info = pltpu.get_tpu_info()
        for attr in ("num_cores", "num_tensorcores", "tensorcores_per_chip",
                     "cores_per_chip"):
            v = getattr(info, attr, None)
            if isinstance(v, int) and v > 0:
                return v
    except Exception:
        pass
    try:
        kind = jax.devices()[0].device_kind.lower()
        if "v7" in kind:
            return 2
    except Exception:
        pass
    return 1


def _pick_batch_tile(B, cap, sub, num_cores):
    """Largest batch tile <= cap (multiple of `sub`).  Only on multi-TensorCore chips
    do we force >= num_cores grid steps so the 'parallel' axis can be sharded; on
    1-TC chips a forced split just adds per-step overhead and shrinks the MXU M dim."""
    Bp = _round_up(max(B, sub), sub)
    if num_cores >= 2 and Bp > sub:
        per_core = _round_up(pl.cdiv(Bp, num_cores), sub)
        return min(per_core, cap)
    return min(Bp, cap)


def prepare_params(w1, b1, w2, b2, w3, b3, *, compute_dtype=jnp.bfloat16):
    """One-time weight preparation (hoisted out of the per-call hot path):
    pad the latent dim to 128 lanes and cast weights to the MXU compute dtype.
    Weights are (in_features, out_features); biases (out_features,) or (1, out)."""
    hidden = w1.shape[1]
    latent = w3.shape[1]
    Lp = _round_up(max(latent, 128), 128)

    b1 = jnp.reshape(b1, (1, hidden)).astype(jnp.float32)
    b2 = jnp.reshape(b2, (1, hidden)).astype(jnp.float32)
    b3 = jnp.reshape(b3, (1, latent)).astype(jnp.float32)
    if Lp != latent:
        w3 = jnp.pad(w3, ((0, 0), (0, Lp - latent)))
        b3 = jnp.pad(b3, ((0, 0), (0, Lp - latent)))

    return dict(
        w1=w1.astype(compute_dtype), b1=b1,
        w2=w2.astype(compute_dtype), b2=b2,
        w3=w3.astype(compute_dtype), b3=b3,
        latent=latent,
    )


def mhd_common_encoder(x, params, *, max_batch_tile=2048, approximate_gelu=None,
                       num_cores=None):
    """Forward pass. `params` comes from prepare_params (weights already padded/cast)."""
    B, common_dim = x.shape
    w1, b1 = params["w1"], params["b1"]
    w2, b2 = params["w2"], params["b2"]
    w3, b3 = params["w3"], params["b3"]
    latent = params["latent"]
    hidden = w1.shape[1]
    Lp = w3.shape[1]

    if approximate_gelu is None:
        # Performance default: tanh GELU on the bf16 path; exact erf on the f32 path.
        approximate_gelu = (w1.dtype != jnp.float32)

    if num_cores is None:
        num_cores = _infer_num_tensorcores()

    cap = max(_round_up(max_batch_tile, 8), 8)
    bt = _pick_batch_tile(B, cap, 8, num_cores)
    Bp = _round_up(B, bt)
    grid = (Bp // bt,)

    # Only zero-pad batch rows when B is not a tile multiple; the feature dim of x is
    # left unpadded (a (bt, common_dim) block with the full last dim is layout-legal)
    # and the bf16 cast happens in-kernel, so no extra wrapper HBM pass over x.
    xp = jnp.pad(x, ((0, Bp - B), (0, 0))) if Bp != B else x

    def _nbytes(a):
        return int(a.size) * int(a.dtype.itemsize)

    cost = pl.CostEstimate(
        flops=2 * Bp * hidden * (common_dim + hidden + Lp),
        transcendentals=2 * Bp * hidden,
        bytes_accessed=int(_nbytes(xp) + _nbytes(w1) + _nbytes(b1) + _nbytes(w2)
                           + _nbytes(b2) + _nbytes(w3) + _nbytes(b3) + Bp * Lp * 4),
    )

    kernel = functools.partial(_encoder_kernel, approximate_gelu=approximate_gelu)

    out = pl.pallas_call(
        kernel,
        out_shape=jax.ShapeDtypeStruct((Bp, Lp), jnp.float32),
        grid_spec=pltpu.PrefetchScalarGridSpec(
            num_scalar_prefetch=0,
            grid=grid,
            in_specs=[
                pl.BlockSpec((bt, common_dim), lambda i: (i, 0)),     # x tile (full K)
                # Weights/biases have constant index_maps -> VMEM-resident across steps.
                pl.BlockSpec((common_dim, hidden), lambda i: (0, 0)),  # W1
                pl.BlockSpec((1, hidden), lambda i: (0, 0)),           # b1
                pl.BlockSpec((hidden, hidden), lambda i: (0, 0)),      # W2
                pl.BlockSpec((1, hidden), lambda i: (0, 0)),           # b2
                pl.BlockSpec((hidden, Lp), lambda i: (0, 0)),          # W3 (latent padded)
                pl.BlockSpec((1, Lp), lambda i: (0, 0)),               # b3 (latent padded)
            ],
            out_specs=pl.BlockSpec((bt, Lp), lambda i: (i, 0)),        # lane-dense output
        ),
        compiler_params=pltpu.CompilerParams(
            dimension_semantics=("parallel",),
        ),
        cost_estimate=cost,
    )(xp, w1, b1, w2, b2, w3, b3)

    return out[:B, :latent]


def _init_linear(key, fan_in, fan_out):
    # Deterministic synthetic init mimicking PyTorch's U(-1/sqrt(fan_in), 1/sqrt(fan_in)).
    kw, kb = jax.random.split(key)
    bound = 1.0 / math.sqrt(fan_in)
    w = jax.random.uniform(kw, (fan_in, fan_out), jnp.float32, -bound, bound)
    b = jax.random.uniform(kb, (1, fan_out), jnp.float32, -bound, bound)
    return w, b


def _reference(x, w1, b1, w2, b2, w3, b3):
    h = x @ w1 + b1
    h = _gelu_exact(h)
    h = h @ w2 + b2
    h = _gelu_exact(h)
    z = h @ w3 + b3
    norm = jnp.sqrt(jnp.sum(z * z, axis=-1, keepdims=True))
    return z / jnp.maximum(norm, 1e-12)


if __name__ == "__main__":
    common_dim = 64
    latent_dim = 32
    hidden = _HIDDEN
    batch = 16

    key = jax.random.PRNGKey(0)
    kx, k1, k2, k3 = jax.random.split(key, 4)

    x = jax.random.normal(kx, (batch, common_dim), jnp.float32)
    w1, b1 = _init_linear(k1, common_dim, hidden)
    w2, b2 = _init_linear(k2, hidden, hidden)
    w3, b3 = _init_linear(k3, hidden, latent_dim)

    ref = _reference(x, w1, b1, w2, b2, w3, b3)

    # f32 + exact-erf GELU: bit-faithful parity path (tight tolerance).
    params_f32 = prepare_params(w1, b1, w2, b2, w3, b3, compute_dtype=jnp.float32)
    out_f32 = jax.block_until_ready(
        mhd_common_encoder(x, params_f32, approximate_gelu=False))
    if not jnp.allclose(out_f32, ref, atol=1e-5, rtol=1e-5):
        raise AssertionError("f32 Pallas kernel output mismatch vs. JAX reference")

    # bf16 + tanh GELU: MXU/EUP performance default; tolerance-gated vs. f32 reference.
    params_bf16 = prepare_params(w1, b1, w2, b2, w3, b3, compute_dtype=jnp.bfloat16)
    out_bf16 = jax.block_until_ready(mhd_common_encoder(x, params_bf16))
    if not jnp.allclose(out_bf16, ref, atol=5e-2, rtol=0.0):
        raise AssertionError("bf16 Pallas kernel output outside tolerance vs. reference")

    print("KERNEL_OK")
</pallas_src>

<mosaic_0001>
module attributes {stable_mosaic.version = 11 : i64} {
  func.func @_encoder_kernel(%arg0: i32, %arg1: memref<16x64xf32, #tpu.memory_space<vmem>>, %arg2: memref<64x512xf32, #tpu.memory_space<vmem>>, %arg3: memref<1x512xf32, #tpu.memory_space<vmem>>, %arg4: memref<512x512xf32, #tpu.memory_space<vmem>>, %arg5: memref<1x512xf32, #tpu.memory_space<vmem>>, %arg6: memref<512x128xf32, #tpu.memory_space<vmem>>, %arg7: memref<1x128xf32, #tpu.memory_space<vmem>>, %arg8: memref<16x128xf32, #tpu.memory_space<vmem>>) attributes {dimension_semantics = [#tpu.dimension_semantics<parallel>], iteration_bounds = array<i64: 1>, scalar_prefetch = 0 : i64, scratch_operands = 0 : i64, tpu.core_type = #tpu.core_type<tc>, window_params = [{transform_indices = @transform_0, window_bounds = array<i64: 16, 64>}, {pipeline_mode = #tpu.pipeline_mode<synchronous>, transform_indices = @transform_1, window_bounds = array<i64: 64, 512>}, {pipeline_mode = #tpu.pipeline_mode<synchronous>, transform_indices = @transform_2, window_bounds = array<i64: 1, 512>}, {pipeline_mode = #tpu.pipeline_mode<synchronous>, transform_indices = @transform_3, window_bounds = array<i64: 512, 512>}, {pipeline_mode = #tpu.pipeline_mode<synchronous>, transform_indices = @transform_4, window_bounds = array<i64: 1, 512>}, {pipeline_mode = #tpu.pipeline_mode<synchronous>, transform_indices = @transform_5, window_bounds = array<i64: 512, 128>}, {pipeline_mode = #tpu.pipeline_mode<synchronous>, transform_indices = @transform_6, window_bounds = array<i64: 1, 128>}, {transform_indices = @transform_7, window_bounds = array<i64: 16, 128>}]} {
    %c0 = arith.constant 0 : index
    %c0_0 = arith.constant 0 : index
    %0 = vector.load %arg1[%c0, %c0_0] : memref<16x64xf32, #tpu.memory_space<vmem>>, vector<16x64xf32>
    %c0_1 = arith.constant 0 : index
    %c0_2 = arith.constant 0 : index
    %1 = vector.load %arg2[%c0_1, %c0_2] : memref<64x512xf32, #tpu.memory_space<vmem>>, vector<64x512xf32>
    %cst = arith.constant dense<0.000000e+00> : vector<16x512xf32>
    %2 = tpu.matmul %0, %1, %cst {dimension_numbers = #tpu.dot_dimension_numbers<[1], [0], [0], [1], [0, 0, 1, 1], [], []>} : vector<16x64xf32>, vector<64x512xf32>, vector<16x512xf32> -> vector<16x512xf32>
    %c0_3 = arith.constant 0 : index
    %c0_4 = arith.constant 0 : index
    %3 = vector.load %arg3[%c0_3, %c0_4] : memref<1x512xf32, #tpu.memory_space<vmem>>, vector<1x512xf32>
    %4 = vector.broadcast %3 : vector<1x512xf32> to vector<16x512xf32>
    %5 = arith.addf %2, %4 : vector<16x512xf32>
    %cst_5 = arith.constant 5.000000e-01 : f32
    %6 = vector.broadcast %cst_5 : f32 to vector<16x512xf32>
    %7 = arith.mulf %6, %5 : vector<16x512xf32>
    %cst_6 = arith.constant 0.707106769 : f32
    %8 = vector.broadcast %cst_6 : f32 to vector<16x512xf32>
    %9 = arith.mulf %5, %8 : vector<16x512xf32>
    %10 = math.erf %9 : vector<16x512xf32>
    %cst_7 = arith.constant 1.000000e+00 : f32
    %11 = vector.broadcast %cst_7 : f32 to vector<16x512xf32>
    %12 = arith.addf %11, %10 : vector<16x512xf32>
    %13 = arith.mulf %7, %12 : vector<16x512xf32>
    %c0_8 = arith.constant 0 : index
    %c0_9 = arith.constant 0 : index
    %14 = vector.load %arg4[%c0_8, %c0_9] : memref<512x512xf32, #tpu.memory_space<vmem>>, vector<512x512xf32>
    %cst_10 = arith.constant dense<0.000000e+00> : vector<16x512xf32>
    %15 = tpu.matmul %13, %14, %cst_10 {dimension_numbers = #tpu.dot_dimension_numbers<[1], [0], [0], [1], [0, 0, 1, 1], [], []>} : vector<16x512xf32>, vector<512x512xf32>, vector<16x512xf32> -> vector<16x512xf32>
    %c0_11 = arith.constant 0 : index
    %c0_12 = arith.constant 0 : index
    %16 = vector.load %arg5[%c0_11, %c0_12] : memref<1x512xf32, #tpu.memory_space<vmem>>, vector<1x512xf32>
    %17 = vector.broadcast %16 : vector<1x512xf32> to vector<16x512xf32>
    %18 = arith.addf %15, %17 : vector<16x512xf32>
    %cst_13 = arith.constant 5.000000e-01 : f32
    %19 = vector.broadcast %cst_13 : f32 to vector<16x512xf32>
    %20 = arith.mulf %19, %18 : vector<16x512xf32>
    %cst_14 = arith.constant 0.707106769 : f32
    %21 = vector.broadcast %cst_14 : f32 to vector<16x512xf32>
    %22 = arith.mulf %18, %21 : vector<16x512xf32>
    %23 = math.erf %22 : vector<16x512xf32>
    %cst_15 = arith.constant 1.000000e+00 : f32
    %24 = vector.broadcast %cst_15 : f32 to vector<16x512xf32>
    %25 = arith.addf %24, %23 : vector<16x512xf32>
    %26 = arith.mulf %20, %25 : vector<16x512xf32>
    %c0_16 = arith.constant 0 : index
    %c0_17 = arith.constant 0 : index
    %27 = vector.load %arg6[%c0_16, %c0_17] : memref<512x128xf32, #tpu.memory_space<vmem>>, vector<512x128xf32>
    %cst_18 = arith.constant dense<0.000000e+00> : vector<16x128xf32>
    %28 = tpu.matmul %26, %27, %cst_18 {dimension_numbers = #tpu.dot_dimension_numbers<[1], [0], [0], [1], [0, 0, 1, 1], [], []>} : vector<16x512xf32>, vector<512x128xf32>, vector<16x128xf32> -> vector<16x128xf32>
    %c0_19 = arith.constant 0 : index
    %c0_20 = arith.constant 0 : index
    %29 = vector.load %arg7[%c0_19, %c0_20] : memref<1x128xf32, #tpu.memory_space<vmem>>, vector<1x128xf32>
    %30 = vector.broadcast %29 : vector<1x128xf32> to vector<16x128xf32>
    %31 = arith.addf %28, %30 : vector<16x128xf32>
    %32 = arith.mulf %31, %31 : vector<16x128xf32>
    %cst_21 = arith.constant dense<0.000000e+00> : vector<16xf32>
    %33 = vector.multi_reduction <add>, %32, %cst_21 [1] : vector<16x128xf32> to vector<16xf32>
    %34 = vector.shape_cast %33 : vector<16xf32> to vector<16x1xf32>
    %cst_22 = arith.constant 1.000000e-24 : f32
    %35 = vector.broadcast %cst_22 : f32 to vector<16x1xf32>
    %36 = arith.maximumf %34, %35 : vector<16x1xf32>
    %37 = math.rsqrt %36 : vector<16x1xf32>
    %38 = vector.broadcast %37 : vector<16x1xf32> to vector<16x128xf32>
    %39 = arith.mulf %31, %38 : vector<16x128xf32>
    %c0_23 = arith.constant 0 : index
    %c0_24 = arith.constant 0 : index
    %40 = vector.load %arg8[%c0_23, %c0_24] : memref<16x128xf32, #tpu.memory_space<vmem>>, vector<16x128xf32>
    tpu.vector_store %arg8[%c0_23, %c0_24], %39 {strides = array<i32>} : memref<16x128xf32, #tpu.memory_space<vmem>>, vector<16x128xf32>,
    return
  }
  func.func @transform_0(%arg0: i32) -> (i32, i32) {
    %c0_i32 = arith.constant 0 : i32
    %c0_i32_0 = arith.constant 0 : i32
    return %arg0, %c0_i32 : i32, i32
  }
  func.func @transform_1(%arg0: i32) -> (i32, i32) {
    %c0_i32 = arith.constant 0 : i32
    %c0_i32_0 = arith.constant 0 : i32
    %c0_i32_1 = arith.constant 0 : i32
    return %c0_i32, %c0_i32_0 : i32, i32
  }
  func.func @transform_2(%arg0: i32) -> (i32, i32) {
    %c0_i32 = arith.constant 0 : i32
    %c0_i32_0 = arith.constant 0 : i32
    %c0_i32_1 = arith.constant 0 : i32
    return %c0_i32, %c0_i32_0 : i32, i32
  }
  func.func @transform_3(%arg0: i32) -> (i32, i32) {
    %c0_i32 = arith.constant 0 : i32
    %c0_i32_0 = arith.constant 0 : i32
    %c0_i32_1 = arith.constant 0 : i32
    return %c0_i32, %c0_i32_0 : i32, i32
  }
  func.func @transform_4(%arg0: i32) -> (i32, i32) {
    %c0_i32 = arith.constant 0 : i32
    %c0_i32_0 = arith.constant 0 : i32
    %c0_i32_1 = arith.constant 0 : i32
    return %c0_i32, %c0_i32_0 : i32, i32
  }
  func.func @transform_5(%arg0: i32) -> (i32, i32) {
    %c0_i32 = arith.constant 0 : i32
    %c0_i32_0 = arith.constant 0 : i32
    %c0_i32_1 = arith.constant 0 : i32
    return %c0_i32, %c0_i32_0 : i32, i32
  }
  func.func @transform_6(%arg0: i32) -> (i32, i32) {
    %c0_i32 = arith.constant 0 : i32
    %c0_i32_0 = arith.constant 0 : i32
    %c0_i32_1 = arith.constant 0 : i32
    return %c0_i32, %c0_i32_0 : i32, i32
  }
  func.func @transform_7(%arg0: i32) -> (i32, i32) {
    %c0_i32 = arith.constant 0 : i32
    %c0_i32_0 = arith.constant 0 : i32
    return %arg0, %c0_i32 : i32, i32
  }
}

</mosaic_0001>

<llo_original>
// kernel: tpu_custom_call.1
$region0: #{tpu_custom_call.1}
  #allocation0 [shape = 'u32[]', space=smem, size = 0x4, offset = 0x4, fixed_abs, tag = 'smem constant byte address 0x4 - core index']
  #allocation1 [shape = 'u32[72,128]{1,0:T(1,128)}', space=vmem, size = 0x9000, scoped, tag = 'internal scratch']
  %s0 = inlined_call_operand.hbm [shape: f32[16,64], index: 0, kind: input, shape index: {}]
  %s1 = inlined_call_operand.hbm [shape: f32[64,512], index: 1, kind: input, shape index: {}]
  %s2 = inlined_call_operand.hbm [shape: f32[1,512], index: 2, kind: input, shape index: {}]
  %s3 = inlined_call_operand.hbm [shape: f32[512,512], index: 3, kind: input, shape index: {}]
  %s4 = inlined_call_operand.hbm [shape: f32[1,512], index: 4, kind: input, shape index: {}]
  %s5 = inlined_call_operand.hbm [shape: f32[512,128], index: 5, kind: input, shape index: {}]
  %s6 = inlined_call_operand.vmem [shape: f32[1,128], index: 6, kind: input, shape index: {}]
  %s7 = inlined_call_operand.hbm [shape: f32[16,128], index: 7, kind: output, shape index: {}]
  %s8 = sld [smem:[#allocation0]]
  $region62: #{tpu_custom_call.1} parent=0
    _
  %s10 = ssub.s32 1, %s8
  %s11 = scalar_select 0, %s10, %s8
  $region1: #{tpu_custom_call.1} parent=0
    #allocation2 [shape = 'u8[8192]{0}', space=vmem, size = 0x2000, scoped, tag = 'input window, operand 0, single buffered']
    #allocation3 [shape = 's32[1]{0}', space=sflag, size = 0x4, scoped, tag = 'scoped memory for tpu_custom_call.1']
    #allocation4 [shape = 's32[1]{0}', space=sflag, size = 0x4, scoped, tag = 'scoped memory for tpu_custom_call.1']
    #allocation5 [shape = 'u8[131072]{0}', space=vmem, size = 0x20000, scoped, tag = 'input window, operand 1, single buffered']
    #allocation6 [shape = 's32[1]{0}', space=sflag, size = 0x4, scoped, tag = 'scoped memory for tpu_custom_call.1']
    #allocation7 [shape = 'u8[2048]{0}', space=vmem, size = 0x800, scoped, tag = 'input window, operand 2, single buffered']
    #allocation8 [shape = 'u8[1048576]{0}', space=vmem, size = 0x100000, scoped, tag = 'input window, operand 3, single buffered']
    #allocation9 [shape = 's32[1]{0}', space=sflag, size = 0x4, scoped, tag = 'scoped memory for tpu_custom_call.1']
    #allocation10 [shape = 'u8[2048]{0}', space=vmem, size = 0x800, scoped, tag = 'input window, operand 4, single buffered']
    #allocation11 [shape = 'u8[262144]{0}', space=vmem, size = 0x40000, scoped, tag = 'input window, operand 5, single buffered']
    #allocation12 [shape = 's32[1]{0}', space=sflag, size = 0x4, scoped, tag = 'scoped memory for tpu_custom_call.1']
    #allocation13 [shape = 'u8[8192]{0}', space=vmem, size = 0x2000, scoped, tag = 'output window, operand 0, single buffered']
    %12 = vsyncpa [#allocation3], 0
    %13 = vsyncpa [#allocation6], 0
    %14 = vsyncpa [#allocation9], 0
    %15 = vsyncpa [#allocation12], 0
    %16 = vsyncpa [#allocation4], 0
    // Predicated region
    $region2: #{tpu_custom_call.1} parent=1 // pred_check
      _
    $region3: #{tpu_custom_call.1} parent=1 // pred_check_branch
      %18 = sbr.rel (0) target = $region5
    $region4: #{tpu_custom_call.1} parent=1 // pred_region
      %20 = vsyncadd [#allocation3], 0
      %s21 = sshll.u32 %s0, 4
      %s22 = int_to_ptr.hbm [resolvable:$true] %s21
      %s23 = sshll.u32 [#allocation2], 4
      %s24 = int_to_ptr.vmem [resolvable:$true] %s23
      %29 = dma.hbm_to_vmem [thread:$0]  %s22, 256, %s24, [#allocation3], 128, 128, 8
    $region5: #{tpu_custom_call.1} parent=1 // pred_fallthru
      _
    // Predicated region
    $region6: #{tpu_custom_call.1} parent=1 // pred_check
      _
    $region7: #{tpu_custom_call.1} parent=1 // pred_check_branch
      %31 = sbr.rel (0) target = $region9
    $region8: #{tpu_custom_call.1} parent=1 // pred_region
      %33 = vsyncadd [#allocation6], 0
      %s34 = sshll.u32 %s1, 4
      %s35 = int_to_ptr.hbm [resolvable:$true] %s34
      %s36 = sshll.u32 [#allocation5], 4
      %s37 = int_to_ptr.vmem [resolvable:$true] %s36
      %42 = dma.hbm_to_vmem [thread:$0]  %s35, 4096, %s37, [#allocation6], 512, 512, 32
    $region9: #{tpu_custom_call.1} parent=1 // pred_fallthru
      _
    // Predicated region
    $region10: #{tpu_custom_call.1} parent=1 // pred_check
      _
    $region11: #{tpu_custom_call.1} parent=1 // pred_check_branch
      %44 = sbr.rel (0) target = $region13
    $region12: #{tpu_custom_call.1} parent=1 // pred_region
      %46 = vsyncadd [#allocation6], 0
      %s48 = sshll.u32 %s2, 4
      %s49 = int_to_ptr.hbm [resolvable:$true] %s48
      %s50 = sshll.u32 [#allocation7], 4
      %s51 = int_to_ptr.vmem [resolvable:$true] %s50
      %53 = dma.hbm_to_vmem [thread:$0]  %s49, 64, %s51, [#allocation6]
    $region13: #{tpu_custom_call.1} parent=1 // pred_fallthru
      _
    // Predicated region
    $region14: #{tpu_custom_call.1} parent=1 // pred_check
      _
    $region15: #{tpu_custom_call.1} parent=1 // pred_check_branch
      %55 = sbr.rel (0) target = $region17
    $region16: #{tpu_custom_call.1} parent=1 // pred_region
      %57 = vsyncadd [#allocation9], 0
      %s58 = sshll.u32 %s3, 4
      %s59 = int_to_ptr.hbm [resolvable:$true] %s58
      %s60 = sshll.u32 [#allocation8], 4
      %s61 = int_to_ptr.vmem [resolvable:$true] %s60
      %66 = dma.hbm_to_vmem [thread:$0]  %s59, 32768, %s61, [#allocation9], 512, 512, 32
    $region17: #{tpu_custom_call.1} parent=1 // pred_fallthru
      _
    // Predicated region
    $region18: #{tpu_custom_call.1} parent=1 // pred_check
      _
    $region19: #{tpu_custom_call.1} parent=1 // pred_check_branch
      %68 = sbr.rel (0) target = $region21
    $region20: #{tpu_custom_call.1} parent=1 // pred_region
      %70 = vsyncadd [#allocation9], 0
      %s72 = sshll.u32 %s4, 4
      %s73 = int_to_ptr.hbm [resolvable:$true] %s72
      %s74 = sshll.u32 [#allocation10], 4
      %s75 = int_to_ptr.vmem [resolvable:$true] %s74
      %77 = dma.hbm_to_vmem [thread:$0]  %s73, 64, %s75, [#allocation9]
    $region21: #{tpu_custom_call.1} parent=1 // pred_fallthru
      _
    // Predicated region
    $region22: #{tpu_custom_call.1} parent=1 // pred_check
      _
    $region23: #{tpu_custom_call.1} parent=1 // pred_check_branch
      %79 = sbr.rel (0) target = $region25
    $region24: #{tpu_custom_call.1} parent=1 // pred_region
      %81 = vsyncadd [#allocation12], 0
      %s82 = sshll.u32 %s5, 4
      %s83 = int_to_ptr.hbm [resolvable:$true] %s82
      %s84 = sshll.u32 [#allocation11], 4
      %s85 = int_to_ptr.vmem [resolvable:$true] %s84
      %90 = dma.hbm_to_vmem [thread:$0]  %s83, 8192, %s85, [#allocation12], 128, 128, 8
    $region25: #{tpu_custom_call.1} parent=1 // pred_fallthru
      _
    // Predicated region
    $region26: #{tpu_custom_call.1} parent=1 // pred_check
      _
    $region27: #{tpu_custom_call.1} parent=1 // pred_check_branch
      %92 = sbr.rel (0) target = $region29
    $region28: #{tpu_custom_call.1} parent=1 // pred_region
      _
    $region29: #{tpu_custom_call.1} parent=1 // pred_fallthru
      _
    // Predicated region
    $region30: #{tpu_custom_call.1} parent=1 // pred_check
      _
    $region31: #{tpu_custom_call.1} parent=1 // pred_check_branch
      %94 = sbr.rel (0) target = $region33
    $region32: #{tpu_custom_call.1} parent=1 // pred_region
      %96 = dma.done [#allocation3], 256
    $region33: #{tpu_custom_call.1} parent=1 // pred_fallthru
      _
    // Predicated region
    $region34: #{tpu_custom_call.1} parent=1 // pred_check
      _
    $region35: #{tpu_custom_call.1} parent=1 // pred_check_branch
      %98 = sbr.rel (0) target = $region37
    $region36: #{tpu_custom_call.1} parent=1 // pred_region
      %100 = dma.done [#allocation6], 4096
    $region37: #{tpu_custom_call.1} parent=1 // pred_fallthru
      _
    // Predicated region
    $region38: #{tpu_custom_call.1} parent=1 // pred_check
      _
    $region39: #{tpu_custom_call.1} parent=1 // pred_check_branch
      %102 = sbr.rel (0) target = $region41
    $region40: #{tpu_custom_call.1} parent=1 // pred_region
      %104 = dma.done [#allocation6], 64
    $region41: #{tpu_custom_call.1} parent=1 // pred_fallthru
      _
    // Predicated region
    $region42: #{tpu_custom_call.1} parent=1 // pred_check
      _
    $region43: #{tpu_custom_call.1} parent=1 // pred_check_branch
      %106 = sbr.rel (0) target = $region45
    $region44: #{tpu_custom_call.1} parent=1 // pred_region
      %108 = dma.done [#allocation9], 32768
    $region45: #{tpu_custom_call.1} parent=1 // pred_fallthru
      _
    // Predicated region
    $region46: #{tpu_custom_call.1} parent=1 // pred_check
      _
    $region47: #{tpu_custom_call.1} parent=1 // pred_check_branch
      %110 = sbr.rel (0) target = $region49
    $region48: #{tpu_custom_call.1} parent=1 // pred_region
      %112 = dma.done [#allocation9], 64
    $region49: #{tpu_custom_call.1} parent=1 // pred_fallthru
      _
    // Predicated region
    $region50: #{tpu_custom_call.1} parent=1 // pred_check
      _
    $region51: #{tpu_custom_call.1} parent=1 // pred_check_branch
      %114 = sbr.rel (0) target = $region53
    $region52: #{tpu_custom_call.1} parent=1 // pred_region
      %116 = dma.done [#allocation12], 8192
    $region53: #{tpu_custom_call.1} parent=1 // pred_fallthru
      _
    %v117 = vld [vmem:[#allocation2] sm:$0xff]
    %v118 = vld [vmem:[#allocation2 + $0x8] sm:$0xff]
    %v119 = vld [vmem:[#allocation5] sm:$0xff]
    %v120 = vld [vmem:[#allocation5 + $0x8] sm:$0xff]
    %v121 = vld [vmem:[#allocation5 + $0x10] sm:$0xff]
    %v122 = vld [vmem:[#allocation5 + $0x18] sm:$0xff]
    %v123 = vld [vmem:[#allocation5 + $0x20] sm:$0xff]
    %v124 = vld [vmem:[#allocation5 + $0x28] sm:$0xff]
    %v125 = vld [vmem:[#allocation5 + $0x30] sm:$0xff]
    %v126 = vld [vmem:[#allocation5 + $0x38] sm:$0xff]
    %v127 = vld [vmem:[#allocation5 + $0x40] sm:$0xff]
    %v128 = vld [vmem:[#allocation5 + $0x48] sm:$0xff]
    %v129 = vld [vmem:[#allocation5 + $0x50] sm:$0xff]
    %v130 = vld [vmem:[#allocation5 + $0x58] sm:$0xff]
    %v131 = vld [vmem:[#allocation5 + $0x60] sm:$0xff]
    %v132 = vld [vmem:[#allocation5 + $0x68] sm:$0xff]
    %v133 = vld [vmem:[#allocation5 + $0x70] sm:$0xff]
    %v134 = vld [vmem:[#allocation5 + $0x78] sm:$0xff]
    %v135 = vld [vmem:[#allocation5 + $0x80] sm:$0xff]
    %v136 = vld [vmem:[#allocation5 + $0x88] sm:$0xff]
    %v137 = vld [vmem:[#allocation5 + $0x90] sm:$0xff]
    %v138 = vld [vmem:[#allocation5 + $0x98] sm:$0xff]
    %v139 = vld [vmem:[#allocation5 + $0xa0] sm:$0xff]
    %v140 = vld [vmem:[#allocation5 + $0xa8] sm:$0xff]
    %v141 = vld [vmem:[#allocation5 + $0xb0] sm:$0xff]
    %v142 = vld [vmem:[#allocation5 + $0xb8] sm:$0xff]
    %v143 = vld [vmem:[#allocation5 + $0xc0] sm:$0xff]
    %v144 = vld [vmem:[#allocation5 + $0xc8] sm:$0xff]
    %v145 = vld [vmem:[#allocation5 + $0xd0] sm:$0xff]
    %v146 = vld [vmem:[#allocation5 + $0xd8] sm:$0xff]
    %v147 = vld [vmem:[#allocation5 + $0xe0] sm:$0xff]
    %v148 = vld [vmem:[#allocation5 + $0xe8] sm:$0xff]
    %v149 = vld [vmem:[#allocation5 + $0xf0] sm:$0xff]
    %v150 = vld [vmem:[#allocation5 + $0xf8] sm:$0xff]
    %v151 = vld [vmem:[#allocation7] sm:$0xf]
    %v153 = vperm.slane %v151, 0
    %v154 = vperm.slane %v151, 1
    %v155 = vperm.slane %v151, 2
    %v156 = vperm.slane %v151, 3
    %vm161 = vcmask 523264
    %v163 = vsel %vm161, %v117, 0
    %v166 = vsel %vm161, %v118, 0
    %168 = vmatpush.msra.mxu0 0.0
    %169 = vmatpush.msra.mxu0 0.0
    %170 = vmatpush.msra.mxu0 0.0
    %171 = vmatpush.msra.mxu0 0.0
    %172 = vmatpush.msra.mxu0 0.0
    %173 = vmatpush.msra.mxu0 0.0
    %174 = vmatpush.msra.mxu0 0.0
    %175 = vmatpush.msra.mxu0 0.0
    %176 = vmatpush.msra.mxu0 %v147
    %177 = vmatpush.msra.mxu0 %v143
    %178 = vmatpush.msra.mxu0 %v139
    %179 = vmatpush.msra.mxu0 %v135
    %180 = vmatpush.msra.mxu0 %v131
    %181 = vmatpush.msra.mxu0 %v127
    %182 = vmatpush.msra.mxu0 %v123
    %183 = vmatpush.msra.mxu0 %v119
    %184 = vmatmul.f32.gmra.mxu0 %v163
    %v185 = vpop.f32.mrf.mxu0
    %v186 = vadd.f32 %v153, %v185
    %187 = vmatmul.f32.gmra.mxu0 %v166
    %v188 = vpop.f32.mrf.mxu0
    %v189 = vadd.f32 %v153, %v188
    %190 = vdwg.mxu0
    %191 = vmatpush.msra.mxu0 0.0
    %192 = vmatpush.msra.mxu0 0.0
    %193 = vmatpush.msra.mxu0 0.0
    %194 = vmatpush.msra.mxu0 0.0
    %195 = vmatpush.msra.mxu0 0.0
    %196 = vmatpush.msra.mxu0 0.0
    %197 = vmatpush.msra.mxu0 0.0
    %198 = vmatpush.msra.mxu0 0.0
    %199 = vmatpush.msra.mxu0 %v148
    %200 = vmatpush.msra.mxu0 %v144
    %201 = vmatpush.msra.mxu0 %v140
    %202 = vmatpush.msra.mxu0 %v136
    %203 = vmatpush.msra.mxu0 %v132
    %204 = vmatpush.msra.mxu0 %v128
    %205 = vmatpush.msra.mxu0 %v124
    %206 = vmatpush.msra.mxu0 %v120
    %207 = vmatmul.f32.gmra.mxu0 %v163
    %v208 = vpop.f32.mrf.mxu0
    %v209 = vadd.f32 %v154, %v208
    %210 = vmatmul.f32.gmra.mxu0 %v166
    %v211 = vpop.f32.mrf.mxu0
    %v212 = vadd.f32 %v154, %v211
    %213 = vdwg.mxu0
    %214 = vmatpush.msra.mxu0 0.0
    %215 = vmatpush.msra.mxu0 0.0
    %216 = vmatpush.msra.mxu0 0.0
    %217 = vmatpush.msra.mxu0 0.0
    %218 = vmatpush.msra.mxu0 0.0
    %219 = vmatpush.msra.mxu0 0.0
    %220 = vmatpush.msra.mxu0 0.0
    %221 = vmatpush.msra.mxu0 0.0
    %222 = vmatpush.msra.mxu0 %v149
    %223 = vmatpush.msra.mxu0 %v145
    %224 = vmatpush.msra.mxu0 %v141
    %225 = vmatpush.msra.mxu0 %v137
    %226 = vmatpush.msra.mxu0 %v133
    %227 = vmatpush.msra.mxu0 %v129
    %228 = vmatpush.msra.mxu0 %v125
    %229 = vmatpush.msra.mxu0 %v121
    %230 = vmatmul.f32.gmra.mxu0 %v163
    %v231 = vpop.f32.mrf.mxu0
    %v232 = vadd.f32 %v155, %v231
    %233 = vmatmul.f32.gmra.mxu0 %v166
    %v234 = vpop.f32.mrf.mxu0
    %v235 = vadd.f32 %v155, %v234
    %236 = vdwg.mxu0
    %237 = vmatpush.msra.mxu0 0.0
    %238 = vmatpush.msra.mxu0 0.0
    %239 = vmatpush.msra.mxu0 0.0
    %240 = vmatpush.msra.mxu0 0.0
    %241 = vmatpush.msra.mxu0 0.0
    %242 = vmatpush.msra.mxu0 0.0
    %243 = vmatpush.msra.mxu0 0.0
    %244 = vmatpush.msra.mxu0 0.0
    %245 = vmatpush.msra.mxu0 %v150
    %246 = vmatpush.msra.mxu0 %v146
    %247 = vmatpush.msra.mxu0 %v142
    %248 = vmatpush.msra.mxu0 %v138
    %249 = vmatpush.msra.mxu0 %v134
    %250 = vmatpush.msra.mxu0 %v130
    %251 = vmatpush.msra.mxu0 %v126
    %252 = vmatpush.msra.mxu0 %v122
    %253 = vmatmul.f32.gmra.mxu0 %v163
    %v254 = vpop.f32.mrf.mxu0
    %v255 = vadd.f32 %v156, %v254
    %256 = vmatmul.f32.gmra.mxu0 %v166
    %v257 = vpop.f32.mrf.mxu0
    %v258 = vadd.f32 %v156, %v257
    %259 = vdwg.mxu0
    %v260 = vmul.f32 %v186, 0.5
    %v261 = vmul.f32 %v209, 0.5
    %v262 = vmul.f32 %v232, 0.5
    %v263 = vmul.f32 %v255, 0.5
    %v264 = vmul.f32 %v189, 0.5
    %v265 = vmul.f32 %v212, 0.5
    %v266 = vmul.f32 %v235, 0.5
    %v267 = vmul.f32 %v258, 0.5
    %v268 = vmul.f32 %v186, 0.70710677
    %v269 = vmul.f32 %v209, 0.70710677
    %v270 = vmul.f32 %v232, 0.70710677
    %v271 = vmul.f32 %v255, 0.70710677
    %v272 = vmul.f32 %v189, 0.70710677
    %v273 = vmul.f32 %v212, 0.70710677
    %v274 = vmul.f32 %v235, 0.70710677
    %v275 = vmul.f32 %v258, 0.70710677
    %v276 = vmul.f32 %v268, %v268
    %v277 = vmin.f32 16.0, %v276
    %v278 = vmul.f32 %v277, 2.1237322e-06
    %v279 = vadd.f32 %v278, 0.00028619796
    %v280 = vmul.f32 %v277, %v279
    %v281 = vadd.f32 %v280, 0.0036580483
    %v282 = vmul.f32 %v277, %v281
    %v283 = vadd.f32 %v282, 0.05243302
    %v284 = vmul.f32 %v277, %v283
    %v285 = vadd.f32 %v284, 0.18741608
    %v286 = vmul.f32 %v277, %v285
    %v287 = vadd.f32 %v286, 1.1283791
    %v288 = vmul.f32 %v268, %v287
    %v289 = vmul.f32 %v277, 3.8918573e-05
    %v290 = vadd.f32 %v289, 0.001143296
    %v291 = vmul.f32 %v277, %v290
    %v292 = vadd.f32 %v291, 0.014752088
    %v293 = vmul.f32 %v277, %v292
    %v294 = vadd.f32 %v293, 0.112945676
    %v295 = vmul.f32 %v277, %v294
    %v296 = vadd.f32 %v295, 0.4994258
    %v297 = vmul.f32 %v277, %v296
    %v298 = vadd.f32 %v297, 1.0
    %v299 = vrcp.pop %v298
    %v300 = vmul.f32 %v298, %v299
    %v301 = vsub.f32 1.0, %v300
    %v302 = vmul.f32 %v299, %v301
    %v303 = vadd.f32 %v299, %v302
    %vm304 = vweird.f32 %v298
    %vm305 = vweird.f32 %v299
    %vm306 = vmor %vm304, %vm305
    %v307 = vsel %vm306, %v299, %v303
    %v308 = vand.u32 2147483647, %v298
    %vm309 = vcmp.eq.f32.partialorder %v308, 8.507059e+37
    %v310 = vand.u32 %v298, 2147483648
    %v311 = vor.u32 1.1754944e-38, %v310
    %v312 = vsel %vm309, %v311, %v307
    %v313 = vmul.f32 %v288, %v312
    %v314 = vmin.f32 %v313, 1.0
    %v315 = vmax.f32 %v314, -1.0
    %v316 = vmul.f32 %v269, %v269
    %v317 = vmin.f32 16.0, %v316
    %v318 = vmul.f32 %v317, 2.1237322e-06
    %v319 = vadd.f32 %v318, 0.00028619796
    %v320 = vmul.f32 %v317, %v319
    %v321 = vadd.f32 %v320, 0.0036580483
    %v322 = vmul.f32 %v317, %v321
    %v323 = vadd.f32 %v322, 0.05243302
    %v324 = vmul.f32 %v317, %v323
    %v325 = vadd.f32 %v324, 0.18741608
    %v326 = vmul.f32 %v317, %v325
    %v327 = vadd.f32 %v326, 1.1283791
    %v328 = vmul.f32 %v269, %v327
    %v329 = vmul.f32 %v317, 3.8918573e-05
    %v330 = vadd.f32 %v329, 0.001143296
    %v331 = vmul.f32 %v317, %v330
    %v332 = vadd.f32 %v331, 0.014752088
    %v333 = vmul.f32 %v317, %v332
    %v334 = vadd.f32 %v333, 0.112945676
    %v335 = vmul.f32 %v317, %v334
    %v336 = vadd.f32 %v335, 0.4994258
    %v337 = vmul.f32 %v317, %v336
    %v338 = vadd.f32 %v337, 1.0
    %v339 = vrcp.pop %v338
    %v340 = vmul.f32 %v338, %v339
    %v341 = vsub.f32 1.0, %v340
    %v342 = vmul.f32 %v339, %v341
    %v343 = vadd.f32 %v339, %v342
    %vm344 = vweird.f32 %v338
    %vm345 = vweird.f32 %v339
    %vm346 = vmor %vm344, %vm345
    %v347 = vsel %vm346, %v339, %v343
    %v348 = vand.u32 2147483647, %v338
    %vm349 = vcmp.eq.f32.partialorder %v348, 8.507059e+37
    %v350 = vand.u32 %v338, 2147483648
    %v351 = vor.u32 1.1754944e-38, %v350
    %v352 = vsel %vm349, %v351, %v347
    %v353 = vmul.f32 %v328, %v352
    %v354 = vmin.f32 %v353, 1.0
    %v355 = vmax.f32 %v354, -1.0
    %v356 = vmul.f32 %v270, %v270
    %v357 = vmin.f32 16.0, %v356
    %v358 = vmul.f32 %v357, 2.1237322e-06
    %v359 = vadd.f32 %v358, 0.00028619796
    %v360 = vmul.f32 %v357, %v359
    %v361 = vadd.f32 %v360, 0.0036580483
    %v362 = vmul.f32 %v357, %v361
    %v363 = vadd.f32 %v362, 0.05243302
    %v364 = vmul.f32 %v357, %v363
    %v365 = vadd.f32 %v364, 0.18741608
    %v366 = vmul.f32 %v357, %v365
    %v367 = vadd.f32 %v366, 1.1283791
    %v368 = vmul.f32 %v270, %v367
    %v369 = vmul.f32 %v357, 3.8918573e-05
    %v370 = vadd.f32 %v369, 0.001143296
    %v371 = vmul.f32 %v357, %v370
    %v372 = vadd.f32 %v371, 0.014752088
    %v373 = vmul.f32 %v357, %v372
    %v374 = vadd.f32 %v373, 0.112945676
    %v375 = vmul.f32 %v357, %v374
    %v376 = vadd.f32 %v375, 0.4994258
    %v377 = vmul.f32 %v357, %v376
    %v378 = vadd.f32 %v377, 1.0
    %v379 = vrcp.pop %v378
    %v380 = vmul.f32 %v378, %v379
    %v381 = vsub.f32 1.0, %v380
    %v382 = vmul.f32 %v379, %v381
    %v383 = vadd.f32 %v379, %v382
    %vm384 = vweird.f32 %v378
    %vm385 = vweird.f32 %v379
    %vm386 = vmor %vm384, %vm385
    %v387 = vsel %vm386, %v379, %v383
    %v388 = vand.u32 2147483647, %v378
    %vm389 = vcmp.eq.f32.partialorder %v388, 8.507059e+37
    %v390 = vand.u32 %v378, 2147483648
    %v391 = vor.u32 1.1754944e-38, %v390
    %v392 = vsel %vm389, %v391, %v387
    %v393 = vmul.f32 %v368, %v392
    %v394 = vmin.f32 %v393, 1.0
    %v395 = vmax.f32 %v394, -1.0
    %v396 = vmul.f32 %v271, %v271
    %v397 = vmin.f32 16.0, %v396
    %v398 = vmul.f32 %v397, 2.1237322e-06
    %v399 = vadd.f32 %v398, 0.00028619796
    %v400 = vmul.f32 %v397, %v399
    %v401 = vadd.f32 %v400, 0.0036580483
    %v402 = vmul.f32 %v397, %v401
    %v403 = vadd.f32 %v402, 0.05243302
    %v404 = vmul.f32 %v397, %v403
    %v405 = vadd.f32 %v404, 0.18741608
    %v406 = vmul.f32 %v397, %v405
    %v407 = vadd.f32 %v406, 1.1283791
    %v408 = vmul.f32 %v271, %v407
    %v409 = vmul.f32 %v397, 3.8918573e-05
    %v410 = vadd.f32 %v409, 0.001143296
    %v411 = vmul.f32 %v397, %v410
    %v412 = vadd.f32 %v411, 0.014752088
    %v413 = vmul.f32 %v397, %v412
    %v414 = vadd.f32 %v413, 0.112945676
    %v415 = vmul.f32 %v397, %v414
    %v416 = vadd.f32 %v415, 0.4994258
    %v417 = vmul.f32 %v397, %v416
    %v418 = vadd.f32 %v417, 1.0
    %v419 = vrcp.pop %v418
    %v420 = vmul.f32 %v418, %v419
    %v421 = vsub.f32 1.0, %v420
    %v422 = vmul.f32 %v419, %v421
    %v423 = vadd.f32 %v419, %v422
    %vm424 = vweird.f32 %v418
    %vm425 = vweird.f32 %v419
    %vm426 = vmor %vm424, %vm425
    %v427 = vsel %vm426, %v419, %v423
    %v428 = vand.u32 2147483647, %v418
    %vm429 = vcmp.eq.f32.partialorder %v428, 8.507059e+37
    %v430 = vand.u32 %v418, 2147483648
    %v431 = vor.u32 1.1754944e-38, %v430
    %v432 = vsel %vm429, %v431, %v427
    %v433 = vmul.f32 %v408, %v432
    %v434 = vmin.f32 %v433, 1.0
    %v435 = vmax.f32 %v434, -1.0
    %v436 = vmul.f32 %v272, %v272
    %v437 = vmin.f32 16.0, %v436
    %v438 = vmul.f32 %v437, 2.1237322e-06
    %v439 = vadd.f32 %v438, 0.00028619796
    %v440 = vmul.f32 %v437, %v439
    %v441 = vadd.f32 %v440, 0.0036580483
    %v442 = vmul.f32 %v437, %v441
    %v443 = vadd.f32 %v442, 0.05243302
    %v444 = vmul.f32 %v437, %v443
    %v445 = vadd.f32 %v444, 0.18741608
    %v446 = vmul.f32 %v437, %v445
    %v447 = vadd.f32 %v446, 1.1283791
    %v448 = vmul.f32 %v272, %v447
    %v449 = vmul.f32 %v437, 3.8918573e-05
    %v450 = vadd.f32 %v449, 0.001143296
    %v451 = vmul.f32 %v437, %v450
    %v452 = vadd.f32 %v451, 0.014752088
    %v453 = vmul.f32 %v437, %v452
    %v454 = vadd.f32 %v453, 0.112945676
    %v455 = vmul.f32 %v437, %v454
    %v456 = vadd.f32 %v455, 0.4994258
    %v457 = vmul.f32 %v437, %v456
    %v458 = vadd.f32 %v457, 1.0
    %v459 = vrcp.pop %v458
    %v460 = vmul.f32 %v458, %v459
    %v461 = vsub.f32 1.0, %v460
    %v462 = vmul.f32 %v459, %v461
    %v463 = vadd.f32 %v459, %v462
    %vm464 = vweird.f32 %v458
    %vm465 = vweird.f32 %v459
    %vm466 = vmor %vm464, %vm465
    %v467 = vsel %vm466, %v459, %v463
    %v468 = vand.u32 2147483647, %v458
    %vm469 = vcmp.eq.f32.partialorder %v468, 8.507059e+37
    %v470 = vand.u32 %v458, 2147483648
    %v471 = vor.u32 1.1754944e-38, %v470
    %v472 = vsel %vm469, %v471, %v467
    %v473 = vmul.f32 %v448, %v472
    %v474 = vmin.f32 %v473, 1.0
    %v475 = vmax.f32 %v474, -1.0
    %v476 = vmul.f32 %v273, %v273
    %v477 = vmin.f32 16.0, %v476
    %v478 = vmul.f32 %v477, 2.1237322e-06
    %v479 = vadd.f32 %v478, 0.00028619796
    %v480 = vmul.f32 %v477, %v479
    %v481 = vadd.f32 %v480, 0.0036580483
    %v482 = vmul.f32 %v477, %v481
    %v483 = vadd.f32 %v482, 0.05243302
    %v484 = vmul.f32 %v477, %v483
    %v485 = vadd.f32 %v484, 0.18741608
    %v486 = vmul.f32 %v477, %v485
    %v487 = vadd.f32 %v486, 1.1283791
    %v488 = vmul.f32 %v273, %v487
    %v489 = vmul.f32 %v477, 3.8918573e-05
    %v490 = vadd.f32 %v489, 0.001143296
    %v491 = vmul.f32 %v477, %v490
    %v492 = vadd.f32 %v491, 0.014752088
    %v493 = vmul.f32 %v477, %v492
    %v494 = vadd.f32 %v493, 0.112945676
    %v495 = vmul.f32 %v477, %v494
    %v496 = vadd.f32 %v495, 0.4994258
    %v497 = vmul.f32 %v477, %v496
    %v498 = vadd.f32 %v497, 1.0
    %v499 = vrcp.pop %v498
    %v500 = vmul.f32 %v498, %v499
    %v501 = vsub.f32 1.0, %v500
    %v502 = vmul.f32 %v499, %v501
    %v503 = vadd.f32 %v499, %v502
    %vm504 = vweird.f32 %v498
    %vm505 = vweird.f32 %v499
    %vm506 = vmor %vm504, %vm505
    %v507 = vsel %vm506, %v499, %v503
    %v508 = vand.u32 2147483647, %v498
    %vm509 = vcmp.eq.f32.partialorder %v508, 8.507059e+37
    %v510 = vand.u32 %v498, 2147483648
    %v511 = vor.u32 1.1754944e-38, %v510
    %v512 = vsel %vm509, %v511, %v507
    %v513 = vmul.f32 %v488, %v512
    %v514 = vmin.f32 %v513, 1.0
    %v515 = vmax.f32 %v514, -1.0
    %v516 = vmul.f32 %v274, %v274
    %v517 = vmin.f32 16.0, %v516
    %v518 = vmul.f32 %v517, 2.1237322e-06
    %v519 = vadd.f32 %v518, 0.00028619796
    %v520 = vmul.f32 %v517, %v519
    %v521 = vadd.f32 %v520, 0.0036580483
    %v522 = vmul.f32 %v517, %v521
    %v523 = vadd.f32 %v522, 0.05243302
    %v524 = vmul.f32 %v517, %v523
    %v525 = vadd.f32 %v524, 0.18741608
    %v526 = vmul.f32 %v517, %v525
    %v527 = vadd.f32 %v526, 1.1283791
    %v528 = vmul.f32 %v274, %v527
    %v529 = vmul.f32 %v517, 3.8918573e-05
    %v530 = vadd.f32 %v529, 0.001143296
    %v531 = vmul.f32 %v517, %v530
    %v532 = vadd.f32 %v531, 0.014752088
    %v533 = vmul.f32 %v517, %v532
    %v534 = vadd.f32 %v533, 0.112945676
    %v535 = vmul.f32 %v517, %v534
    %v536 = vadd.f32 %v535, 0.4994258
    %v537 = vmul.f32 %v517, %v536
    %v538 = vadd.f32 %v537, 1.0
    %v539 = vrcp.pop %v538
    %v540 = vmul.f32 %v538, %v539
    %v541 = vsub.f32 1.0, %v540
    %v542 = vmul.f32 %v539, %v541
    %v543 = vadd.f32 %v539, %v542
    %vm544 = vweird.f32 %v538
    %vm545 = vweird.f32 %v539
    %vm546 = vmor %vm544, %vm545
    %v547 = vsel %vm546, %v539, %v543
    %v548 = vand.u32 2147483647, %v538
    %vm549 = vcmp.eq.f32.partialorder %v548, 8.507059e+37
    %v550 = vand.u32 %v538, 2147483648
    %v551 = vor.u32 1.1754944e-38, %v550
    %v552 = vsel %vm549, %v551, %v547
    %v553 = vmul.f32 %v528, %v552
    %v554 = vmin.f32 %v553, 1.0
    %v555 = vmax.f32 %v554, -1.0
    %v556 = vmul.f32 %v275, %v275
    %v557 = vmin.f32 16.0, %v556
    %v558 = vmul.f32 %v557, 2.1237322e-06
    %v559 = vadd.f32 %v558, 0.00028619796
    %v560 = vmul.f32 %v557, %v559
    %v561 = vadd.f32 %v560, 0.0036580483
    %v562 = vmul.f32 %v557, %v561
    %v563 = vadd.f32 %v562, 0.05243302
    %v564 = vmul.f32 %v557, %v563
    %v565 = vadd.f32 %v564, 0.18741608
    %v566 = vmul.f32 %v557, %v565
    %v567 = vadd.f32 %v566, 1.1283791
    %v568 = vmul.f32 %v275, %v567
    %v569 = vmul.f32 %v557, 3.8918573e-05
    %v570 = vadd.f32 %v569, 0.001143296
    %v571 = vmul.f32 %v557, %v570
    %v572 = vadd.f32 %v571, 0.014752088
    %v573 = vmul.f32 %v557, %v572
    %v574 = vadd.f32 %v573, 0.112945676
    %v575 = vmul.f32 %v557, %v574
    %v576 = vadd.f32 %v575, 0.4994258
    %v577 = vmul.f32 %v557, %v576
    %v578 = vadd.f32 %v577, 1.0
    %v579 = vrcp.pop %v578
    %v580 = vmul.f32 %v578, %v579
    %v581 = vsub.f32 1.0, %v580
    %v582 = vmul.f32 %v579, %v581
    %v583 = vadd.f32 %v579, %v582
    %vm584 = vweird.f32 %v578
    %vm585 = vweird.f32 %v579
    %vm586 = vmor %vm584, %vm585
    %v587 = vsel %vm586, %v579, %v583
    %v588 = vand.u32 2147483647, %v578
    %vm589 = vcmp.eq.f32.partialorder %v588, 8.507059e+37
    %v590 = vand.u32 %v578, 2147483648
    %v591 = vor.u32 1.1754944e-38, %v590
    %v592 = vsel %vm589, %v591, %v587
    %v593 = vmul.f32 %v568, %v592
    %v594 = vmin.f32 %v593, 1.0
    %v595 = vmax.f32 %v594, -1.0
    %v596 = vadd.f32 %v315, 1.0
    %v597 = vadd.f32 %v355, 1.0
    %v598 = vadd.f32 %v395, 1.0
    %v599 = vadd.f32 %v435, 1.0
    %v600 = vadd.f32 %v475, 1.0
    %v601 = vadd.f32 %v515, 1.0
    %v602 = vadd.f32 %v555, 1.0
    %v603 = vadd.f32 %v595, 1.0
    %v604 = vmul.f32 %v260, %v596
    %v605 = vmul.f32 %v261, %v597
    %v606 = vmul.f32 %v262, %v598
    %v607 = vmul.f32 %v263, %v599
    %v608 = vmul.f32 %v264, %v600
    %v609 = vmul.f32 %v265, %v601
    %v610 = vmul.f32 %v266, %v602
    %v611 = vmul.f32 %v267, %v603
    %v612 = vld [vmem:[#allocation8] sm:$0xff]
    %v613 = vld [vmem:[#allocation8 + $0x8] sm:$0xff]
    %v614 = vld [vmem:[#allocation8 + $0x10] sm:$0xff]
    %v615 = vld [vmem:[#allocation8 + $0x18] sm:$0xff]
    %v616 = vld [vmem:[#allocation8 + $0x20] sm:$0xff]
    %v617 = vld [vmem:[#allocation8 + $0x28] sm:$0xff]
    %v618 = vld [vmem:[#allocation8 + $0x30] sm:$0xff]
    %v619 = vld [vmem:[#allocation8 + $0x38] sm:$0xff]
    %v620 = vld [vmem:[#allocation8 + $0x40] sm:$0xff]
    %v621 = vld [vmem:[#allocation8 + $0x48] sm:$0xff]
    %v622 = vld [vmem:[#allocation8 + $0x50] sm:$0xff]
    %v623 = vld [vmem:[#allocation8 + $0x58] sm:$0xff]
    %v624 = vld [vmem:[#allocation8 + $0x60] sm:$0xff]
    %v625 = vld [vmem:[#allocation8 + $0x68] sm:$0xff]
    %v626 = vld [vmem:[#allocation8 + $0x70] sm:$0xff]
    %v627 = vld [vmem:[#allocation8 + $0x78] sm:$0xff]
    %v628 = vld [vmem:[#allocation8 + $0x80] sm:$0xff]
    %v629 = vld [vmem:[#allocation8 + $0x88] sm:$0xff]
    %v630 = vld [vmem:[#allocation8 + $0x90] sm:$0xff]
    %v631 = vld [vmem:[#allocation8 + $0x98] sm:$0xff]
    %v632 = vld [vmem:[#allocation8 + $0xa0] sm:$0xff]
    %v633 = vld [vmem:[#allocation8 + $0xa8] sm:$0xff]
    %v634 = vld [vmem:[#allocation8 + $0xb0] sm:$0xff]
    %v635 = vld [vmem:[#allocation8 + $0xb8] sm:$0xff]
    %v636 = vld [vmem:[#allocation8 + $0xc0] sm:$0xff]
    %v637 = vld [vmem:[#allocation8 + $0xc8] sm:$0xff]
    %v638 = vld [vmem:[#allocation8 + $0xd0] sm:$0xff]
    %v639 = vld [vmem:[#allocation8 + $0xd8] sm:$0xff]
    %v640 = vld [vmem:[#allocation8 + $0xe0] sm:$0xff]
    %v641 = vld [vmem:[#allocation8 + $0xe8] sm:$0xff]
    %v642 = vld [vmem:[#allocation8 + $0xf0] sm:$0xff]
    %v643 = vld [vmem:[#allocation8 + $0xf8] sm:$0xff]
    %v644 = vld [vmem:[#allocation8 + $0x100] sm:$0xff]
    %v645 = vld [vmem:[#allocation8 + $0x108] sm:$0xff]
    %v646 = vld [vmem:[#allocation8 + $0x110] sm:$0xff]
    %v647 = vld [vmem:[#allocation8 + $0x118] sm:$0xff]
    %v648 = vld [vmem:[#allocation8 + $0x120] sm:$0xff]
    %v649 = vld [vmem:[#allocation8 + $0x128] sm:$0xff]
    %v650 = vld [vmem:[#allocation8 + $0x130] sm:$0xff]
    %v651 = vld [vmem:[#allocation8 + $0x138] sm:$0xff]
    %v652 = vld [vmem:[#allocation8 + $0x140] sm:$0xff]
    %v653 = vld [vmem:[#allocation8 + $0x148] sm:$0xff]
    %v654 = vld [vmem:[#allocation8 + $0x150] sm:$0xff]
    %v655 = vld [vmem:[#allocation8 + $0x158] sm:$0xff]
    %v656 = vld [vmem:[#allocation8 + $0x160] sm:$0xff]
    %v657 = vld [vmem:[#allocation8 + $0x168] sm:$0xff]
    %v658 = vld [vmem:[#allocation8 + $0x170] sm:$0xff]
    %v659 = vld [vmem:[#allocation8 + $0x178] sm:$0xff]
    %v660 = vld [vmem:[#allocation8 + $0x180] sm:$0xff]
    %v661 = vld [vmem:[#allocation8 + $0x188] sm:$0xff]
    %v662 = vld [vmem:[#allocation8 + $0x190] sm:$0xff]
    %v663 = vld [vmem:[#allocation8 + $0x198] sm:$0xff]
    %v664 = vld [vmem:[#allocation8 + $0x1a0] sm:$0xff]
    %v665 = vld [vmem:[#allocation8 + $0x1a8] sm:$0xff]
    %v666 = vld [vmem:[#allocation8 + $0x1b0] sm:$0xff]
    %v667 = vld [vmem:[#allocation8 + $0x1b8] sm:$0xff]
    %v668 = vld [vmem:[#allocation8 + $0x1c0] sm:$0xff]
    %v669 = vld [vmem:[#allocation8 + $0x1c8] sm:$0xff]
    %v670 = vld [vmem:[#allocation8 + $0x1d0] sm:$0xff]
    %v671 = vld [vmem:[#allocation8 + $0x1d8] sm:$0xff]
    %v672 = vld [vmem:[#allocation8 + $0x1e0] sm:$0xff]
    %v673 = vld [vmem:[#allocation8 + $0x1e8] sm:$0xff]
    %v674 = vld [vmem:[#allocation8 + $0x1f0] sm:$0xff]
    %v675 = vld [vmem:[#allocation8 + $0x1f8] sm:$0xff]
    %v676 = vld [vmem:[#allocation8 + $0x200] sm:$0xff]
    %v677 = vld [vmem:[#allocation8 + $0x208] sm:$0xff]
    %v678 = vld [vmem:[#allocation8 + $0x210] sm:$0xff]
    %v679 = vld [vmem:[#allocation8 + $0x218] sm:$0xff]
    %v680 = vld [vmem:[#allocation8 + $0x220] sm:$0xff]
    %v681 = vld [vmem:[#allocation8 + $0x228] sm:$0xff]
    %v682 = vld [vmem:[#allocation8 + $0x230] sm:$0xff]
    %v683 = vld [vmem:[#allocation8 + $0x238] sm:$0xff]
    %v684 = vld [vmem:[#allocation8 + $0x240] sm:$0xff]
    %v685 = vld [vmem:[#allocation8 + $0x248] sm:$0xff]
    %v686 = vld [vmem:[#allocation8 + $0x250] sm:$0xff]
    %v687 = vld [vmem:[#allocation8 + $0x258] sm:$0xff]
    %v688 = vld [vmem:[#allocation8 + $0x260] sm:$0xff]
    %v689 = vld [vmem:[#allocation8 + $0x268] sm:$0xff]
    %v690 = vld [vmem:[#allocation8 + $0x270] sm:$0xff]
    %v691 = vld [vmem:[#allocation8 + $0x278] sm:$0xff]
    %v692 = vld [vmem:[#allocation8 + $0x280] sm:$0xff]
    %v693 = vld [vmem:[#allocation8 + $0x288] sm:$0xff]
    %v694 = vld [vmem:[#allocation8 + $0x290] sm:$0xff]
    %v695 = vld [vmem:[#allocation8 + $0x298] sm:$0xff]
    %v696 = vld [vmem:[#allocation8 + $0x2a0] sm:$0xff]
    %v697 = vld [vmem:[#allocation8 + $0x2a8] sm:$0xff]
    %v698 = vld [vmem:[#allocation8 + $0x2b0] sm:$0xff]
    %v699 = vld [vmem:[#allocation8 + $0x2b8] sm:$0xff]
    %v700 = vld [vmem:[#allocation8 + $0x2c0] sm:$0xff]
    %v701 = vld [vmem:[#allocation8 + $0x2c8] sm:$0xff]
    %v702 = vld [vmem:[#allocation8 + $0x2d0] sm:$0xff]
    %v703 = vld [vmem:[#allocation8 + $0x2d8] sm:$0xff]
    %v704 = vld [vmem:[#allocation8 + $0x2e0] sm:$0xff]
    %v705 = vld [vmem:[#allocation8 + $0x2e8] sm:$0xff]
    %v706 = vld [vmem:[#allocation8 + $0x2f0] sm:$0xff]
    %v707 = vld [vmem:[#allocation8 + $0x2f8] sm:$0xff]
    %v708 = vld [vmem:[#allocation8 + $0x300] sm:$0xff]
    %v709 = vld [vmem:[#allocation8 + $0x308] sm:$0xff]
    %v710 = vld [vmem:[#allocation8 + $0x310] sm:$0xff]
    %v711 = vld [vmem:[#allocation8 + $0x318] sm:$0xff]
    %v712 = vld [vmem:[#allocation8 + $0x320] sm:$0xff]
    %v713 = vld [vmem:[#allocation8 + $0x328] sm:$0xff]
    %v714 = vld [vmem:[#allocation8 + $0x330] sm:$0xff]
    %v715 = vld [vmem:[#allocation8 + $0x338] sm:$0xff]
    %v716 = vld [vmem:[#allocation8 + $0x340] sm:$0xff]
    %v717 = vld [vmem:[#allocation8 + $0x348] sm:$0xff]
    %v718 = vld [vmem:[#allocation8 + $0x350] sm:$0xff]
    %v719 = vld [vmem:[#allocation8 + $0x358] sm:$0xff]
    %v720 = vld [vmem:[#allocation8 + $0x360] sm:$0xff]
    %v721 = vld [vmem:[#allocation8 + $0x368] sm:$0xff]
    %v722 = vld [vmem:[#allocation8 + $0x370] sm:$0xff]
    %v723 = vld [vmem:[#allocation8 + $0x378] sm:$0xff]
    %v724 = vld [vmem:[#allocation8 + $0x380] sm:$0xff]
    %v725 = vld [vmem:[#allocation8 + $0x388] sm:$0xff]
    %v726 = vld [vmem:[#allocation8 + $0x390] sm:$0xff]
    %v727 = vld [vmem:[#allocation8 + $0x398] sm:$0xff]
    %v728 = vld [vmem:[#allocation8 + $0x3a0] sm:$0xff]
    %v729 = vld [vmem:[#allocation8 + $0x3a8] sm:$0xff]
    %v730 = vld [vmem:[#allocation8 + $0x3b0] sm:$0xff]
    %v731 = vld [vmem:[#allocation8 + $0x3b8] sm:$0xff]
    %v732 = vld [vmem:[#allocation8 + $0x3c0] sm:$0xff]
    %v733 = vld [vmem:[#allocation8 + $0x3c8] sm:$0xff]
    %v734 = vld [vmem:[#allocation8 + $0x3d0] sm:$0xff]
    %v735 = vld [vmem:[#allocation8 + $0x3d8] sm:$0xff]
    %v736 = vld [vmem:[#allocation8 + $0x3e0] sm:$0xff]
    %v737 = vld [vmem:[#allocation8 + $0x3e8] sm:$0xff]
    %v738 = vld [vmem:[#allocation8 + $0x3f0] sm:$0xff]
    %v739 = vld [vmem:[#allocation8 + $0x3f8] sm:$0xff]
    %v740 = vld [vmem:[#allocation8 + $0x400] sm:$0xff]
    %v741 = vld [vmem:[#allocation8 + $0x408] sm:$0xff]
    %v742 = vld [vmem:[#allocation8 + $0x410] sm:$0xff]
    %v743 = vld [vmem:[#allocation8 + $0x418] sm:$0xff]
    %v744 = vld [vmem:[#allocation8 + $0x420] sm:$0xff]
    %v745 = vld [vmem:[#allocation8 + $0x428] sm:$0xff]
    %v746 = vld [vmem:[#allocation8 + $0x430] sm:$0xff]
    %v747 = vld [vmem:[#allocation8 + $0x438] sm:$0xff]
    %v748 = vld [vmem:[#allocation8 + $0x440] sm:$0xff]
    %v749 = vld [vmem:[#allocation8 + $0x448] sm:$0xff]
    %v750 = vld [vmem:[#allocation8 + $0x450] sm:$0xff]
    %v751 = vld [vmem:[#allocation8 + $0x458] sm:$0xff]
    %v752 = vld [vmem:[#allocation8 + $0x460] sm:$0xff]
    %v753 = vld [vmem:[#allocation8 + $0x468] sm:$0xff]
    %v754 = vld [vmem:[#allocation8 + $0x470] sm:$0xff]
    %v755 = vld [vmem:[#allocation8 + $0x478] sm:$0xff]
    %v756 = vld [vmem:[#allocation8 + $0x480] sm:$0xff]
    %v757 = vld [vmem:[#allocation8 + $0x488] sm:$0xff]
    %v758 = vld [vmem:[#allocation8 + $0x490] sm:$0xff]
    %v759 = vld [vmem:[#allocation8 + $0x498] sm:$0xff]
    %v760 = vld [vmem:[#allocation8 + $0x4a0] sm:$0xff]
    %v761 = vld [vmem:[#allocation8 + $0x4a8] sm:$0xff]
    %v762 = vld [vmem:[#allocation8 + $0x4b0] sm:$0xff]
    %v763 = vld [vmem:[#allocation8 + $0x4b8] sm:$0xff]
    %v764 = vld [vmem:[#allocation8 + $0x4c0] sm:$0xff]
    %v765 = vld [vmem:[#allocation8 + $0x4c8] sm:$0xff]
    %v766 = vld [vmem:[#allocation8 + $0x4d0] sm:$0xff]
    %v767 = vld [vmem:[#allocation8 + $0x4d8] sm:$0xff]
    %v768 = vld [vmem:[#allocation8 + $0x4e0] sm:$0xff]
    %v769 = vld [vmem:[#allocation8 + $0x4e8] sm:$0xff]
    %v770 = vld [vmem:[#allocation8 + $0x4f0] sm:$0xff]
    %v771 = vld [vmem:[#allocation8 + $0x4f8] sm:$0xff]
    %v772 = vld [vmem:[#allocation8 + $0x500] sm:$0xff]
    %v773 = vld [vmem:[#allocation8 + $0x508] sm:$0xff]
    %v774 = vld [vmem:[#allocation8 + $0x510] sm:$0xff]
    %v775 = vld [vmem:[#allocation8 + $0x518] sm:$0xff]
    %v776 = vld [vmem:[#allocation8 + $0x520] sm:$0xff]
    %v777 = vld [vmem:[#allocation8 + $0x528] sm:$0xff]
    %v778 = vld [vmem:[#allocation8 + $0x530] sm:$0xff]
    %v779 = vld [vmem:[#allocation8 + $0x538] sm:$0xff]
    %v780 = vld [vmem:[#allocation8 + $0x540] sm:$0xff]
    %v781 = vld [vmem:[#allocation8 + $0x548] sm:$0xff]
    %v782 = vld [vmem:[#allocation8 + $0x550] sm:$0xff]
    %v783 = vld [vmem:[#allocation8 + $0x558] sm:$0xff]
    %v784 = vld [vmem:[#allocation8 + $0x560] sm:$0xff]
    %v785 = vld [vmem:[#allocation8 + $0x568] sm:$0xff]
    %v786 = vld [vmem:[#allocation8 + $0x570] sm:$0xff]
    %v787 = vld [vmem:[#allocation8 + $0x578] sm:$0xff]
    %v788 = vld [vmem:[#allocation8 + $0x580] sm:$0xff]
    %v789 = vld [vmem:[#allocation8 + $0x588] sm:$0xff]
    %v790 = vld [vmem:[#allocation8 + $0x590] sm:$0xff]
    %v791 = vld [vmem:[#allocation8 + $0x598] sm:$0xff]
    %v792 = vld [vmem:[#allocation8 + $0x5a0] sm:$0xff]
    %v793 = vld [vmem:[#allocation8 + $0x5a8] sm:$0xff]
    %v794 = vld [vmem:[#allocation8 + $0x5b0] sm:$0xff]
    %v795 = vld [vmem:[#allocation8 + $0x5b8] sm:$0xff]
    %v796 = vld [vmem:[#allocation8 + $0x5c0] sm:$0xff]
    %v797 = vld [vmem:[#allocation8 + $0x5c8] sm:$0xff]
    %v798 = vld [vmem:[#allocation8 + $0x5d0] sm:$0xff]
    %v799 = vld [vmem:[#allocation8 + $0x5d8] sm:$0xff]
    %v800 = vld [vmem:[#allocation8 + $0x5e0] sm:$0xff]
    %v801 = vld [vmem:[#allocation8 + $0x5e8] sm:$0xff]
    %v802 = vld [vmem:[#allocation8 + $0x5f0] sm:$0xff]
    %v803 = vld [vmem:[#allocation8 + $0x5f8] sm:$0xff]
    %v804 = vld [vmem:[#allocation8 + $0x600] sm:$0xff]
    %v805 = vld [vmem:[#allocation8 + $0x608] sm:$0xff]
    %v806 = vld [vmem:[#allocation8 + $0x610] sm:$0xff]
    %v807 = vld [vmem:[#allocation8 + $0x618] sm:$0xff]
    %v808 = vld [vmem:[#allocation8 + $0x620] sm:$0xff]
    %v809 = vld [vmem:[#allocation8 + $0x628] sm:$0xff]
    %v810 = vld [vmem:[#allocation8 + $0x630] sm:$0xff]
    %v811 = vld [vmem:[#allocation8 + $0x638] sm:$0xff]
    %v812 = vld [vmem:[#allocation8 + $0x640] sm:$0xff]
    %v813 = vld [vmem:[#allocation8 + $0x648] sm:$0xff]
    %v814 = vld [vmem:[#allocation8 + $0x650] sm:$0xff]
    %v815 = vld [vmem:[#allocation8 + $0x658] sm:$0xff]
    %v816 = vld [vmem:[#allocation8 + $0x660] sm:$0xff]
    %v817 = vld [vmem:[#allocation8 + $0x668] sm:$0xff]
    %v818 = vld [vmem:[#allocation8 + $0x670] sm:$0xff]
    %v819 = vld [vmem:[#allocation8 + $0x678] sm:$0xff]
    %v820 = vld [vmem:[#allocation8 + $0x680] sm:$0xff]
    %v821 = vld [vmem:[#allocation8 + $0x688] sm:$0xff]
    %v822 = vld [vmem:[#allocation8 + $0x690] sm:$0xff]
    %v823 = vld [vmem:[#allocation8 + $0x698] sm:$0xff]
    %v824 = vld [vmem:[#allocation8 + $0x6a0] sm:$0xff]
    %v825 = vld [vmem:[#allocation8 + $0x6a8] sm:$0xff]
    %v826 = vld [vmem:[#allocation8 + $0x6b0] sm:$0xff]
    %v827 = vld [vmem:[#allocation8 + $0x6b8] sm:$0xff]
    %v828 = vld [vmem:[#allocation8 + $0x6c0] sm:$0xff]
    %v829 = vld [vmem:[#allocation8 + $0x6c8] sm:$0xff]
    %v830 = vld [vmem:[#allocation8 + $0x6d0] sm:$0xff]
    %v831 = vld [vmem:[#allocation8 + $0x6d8] sm:$0xff]
    %v832 = vld [vmem:[#allocation8 + $0x6e0] sm:$0xff]
    %v833 = vld [vmem:[#allocation8 + $0x6e8] sm:$0xff]
    %v834 = vld [vmem:[#allocation8 + $0x6f0] sm:$0xff]
    %v835 = vld [vmem:[#allocation8 + $0x6f8] sm:$0xff]
    %v836 = vld [vmem:[#allocation8 + $0x700] sm:$0xff]
    %v837 = vld [vmem:[#allocation8 + $0x708] sm:$0xff]
    %v838 = vld [vmem:[#allocation8 + $0x710] sm:$0xff]
    %v839 = vld [vmem:[#allocation8 + $0x718] sm:$0xff]
    %v840 = vld [vmem:[#allocation8 + $0x720] sm:$0xff]
    %v841 = vld [vmem:[#allocation8 + $0x728] sm:$0xff]
    %v842 = vld [vmem:[#allocation8 + $0x730] sm:$0xff]
    %v843 = vld [vmem:[#allocation8 + $0x738] sm:$0xff]
    %v844 = vld [vmem:[#allocation8 + $0x740] sm:$0xff]
    %v845 = vld [vmem:[#allocation8 + $0x748] sm:$0xff]
    %v846 = vld [vmem:[#allocation8 + $0x750] sm:$0xff]
    %v847 = vld [vmem:[#allocation8 + $0x758] sm:$0xff]
    %v848 = vld [vmem:[#allocation8 + $0x760] sm:$0xff]
    %v849 = vld [vmem:[#allocation8 + $0x768] sm:$0xff]
    %v850 = vld [vmem:[#allocation8 + $0x770] sm:$0xff]
    %v851 = vld [vmem:[#allocation8 + $0x778] sm:$0xff]
    %v852 = vld [vmem:[#allocation8 + $0x780] sm:$0xff]
    %v853 = vld [vmem:[#allocation8 + $0x788] sm:$0xff]
    %v854 = vld [vmem:[#allocation8 + $0x790] sm:$0xff]
    %v855 = vld [vmem:[#allocation8 + $0x798] sm:$0xff]
    %v856 = vld [vmem:[#allocation8 + $0x7a0] sm:$0xff]
    %v857 = vld [vmem:[#allocation8 + $0x7a8] sm:$0xff]
    %v858 = vld [vmem:[#allocation8 + $0x7b0] sm:$0xff]
    %v859 = vld [vmem:[#allocation8 + $0x7b8] sm:$0xff]
    %v860 = vld [vmem:[#allocation8 + $0x7c0] sm:$0xff]
    %v861 = vld [vmem:[#allocation8 + $0x7c8] sm:$0xff]
    %v862 = vld [vmem:[#allocation8 + $0x7d0] sm:$0xff]
    %v863 = vld [vmem:[#allocation8 + $0x7d8] sm:$0xff]
    %v864 = vld [vmem:[#allocation8 + $0x7e0] sm:$0xff]
    %v865 = vld [vmem:[#allocation8 + $0x7e8] sm:$0xff]
    %v866 = vld [vmem:[#allocation8 + $0x7f0] sm:$0xff]
    %v867 = vld [vmem:[#allocation8 + $0x7f8] sm:$0xff]
    %v868 = vld [vmem:[#allocation10] sm:$0xf]
    %v870 = vperm.slane %v868, 0
    %v871 = vperm.slane %v868, 1
    %v872 = vperm.slane %v868, 2
    %v873 = vperm.slane %v868, 3
    %878 = vmatpush.msra.mxu0 %v672
    %879 = vmatpush.msra.mxu0 %v668
    %880 = vmatpush.msra.mxu0 %v664
    %881 = vmatpush.msra.mxu0 %v660
    %882 = vmatpush.msra.mxu0 %v656
    %883 = vmatpush.msra.mxu0 %v652
    %884 = vmatpush.msra.mxu0 %v648
    %885 = vmatpush.msra.mxu0 %v644
    %886 = vmatpush.msra.mxu0 %v640
    %887 = vmatpush.msra.mxu0 %v636
    %888 = vmatpush.msra.mxu0 %v632
    %889 = vmatpush.msra.mxu0 %v628
    %890 = vmatpush.msra.mxu0 %v624
    %891 = vmatpush.msra.mxu0 %v620
    %892 = vmatpush.msra.mxu0 %v616
    %893 = vmatpush.msra.mxu0 %v612
    %894 = vmatmul.f32.gmra.mxu0 %v604
    %v895 = vpop.f32.mrf.mxu0
    %v896 = vadd.f32 %v870, %v895
    %897 = vmatmul.f32.gmra.mxu0 %v608
    %v898 = vpop.f32.mrf.mxu0
    %v899 = vadd.f32 %v870, %v898
    %900 = vdwg.mxu0
    %901 = vmatpush.msra.mxu0 %v736
    %902 = vmatpush.msra.mxu0 %v732
    %903 = vmatpush.msra.mxu0 %v728
    %904 = vmatpush.msra.mxu0 %v724
    %905 = vmatpush.msra.mxu0 %v720
    %906 = vmatpush.msra.mxu0 %v716
    %907 = vmatpush.msra.mxu0 %v712
    %908 = vmatpush.msra.mxu0 %v708
    %909 = vmatpush.msra.mxu0 %v704
    %910 = vmatpush.msra.mxu0 %v700
    %911 = vmatpush.msra.mxu0 %v696
    %912 = vmatpush.msra.mxu0 %v692
    %913 = vmatpush.msra.mxu0 %v688
    %914 = vmatpush.msra.mxu0 %v684
    %915 = vmatpush.msra.mxu0 %v680
    %916 = vmatpush.msra.mxu0 %v676
    %917 = vmatmul.f32.gmra.mxu0 %v605
    %v918 = vpop.f32.mrf.mxu0
    %v919 = vadd.f32 %v896, %v918
    %920 = vmatmul.f32.gmra.mxu0 %v609
    %v921 = vpop.f32.mrf.mxu0
    %v922 = vadd.f32 %v899, %v921
    %923 = vdwg.mxu0
    %924 = vmatpush.msra.mxu0 %v800
    %925 = vmatpush.msra.mxu0 %v796
    %926 = vmatpush.msra.mxu0 %v792
    %927 = vmatpush.msra.mxu0 %v788
    %928 = vmatpush.msra.mxu0 %v784
    %929 = vmatpush.msra.mxu0 %v780
    %930 = vmatpush.msra.mxu0 %v776
    %931 = vmatpush.msra.mxu0 %v772
    %932 = vmatpush.msra.mxu0 %v768
    %933 = vmatpush.msra.mxu0 %v764
    %934 = vmatpush.msra.mxu0 %v760
    %935 = vmatpush.msra.mxu0 %v756
    %936 = vmatpush.msra.mxu0 %v752
    %937 = vmatpush.msra.mxu0 %v748
    %938 = vmatpush.msra.mxu0 %v744
    %939 = vmatpush.msra.mxu0 %v740
    %940 = vmatmul.f32.gmra.mxu0 %v606
    %v941 = vpop.f32.mrf.mxu0
    %v942 = vadd.f32 %v919, %v941
    %943 = vmatmul.f32.gmra.mxu0 %v610
    %v944 = vpop.f32.mrf.mxu0
    %v945 = vadd.f32 %v922, %v944
    %946 = vdwg.mxu0
    %947 = vmatpush.msra.mxu0 %v864
    %948 = vmatpush.msra.mxu0 %v860
    %949 = vmatpush.msra.mxu0 %v856
    %950 = vmatpush.msra.mxu0 %v852
    %951 = vmatpush.msra.mxu0 %v848
    %952 = vmatpush.msra.mxu0 %v844
    %953 = vmatpush.msra.mxu0 %v840
    %954 = vmatpush.msra.mxu0 %v836
    %955 = vmatpush.msra.mxu0 %v832
    %956 = vmatpush.msra.mxu0 %v828
    %957 = vmatpush.msra.mxu0 %v824
    %958 = vmatpush.msra.mxu0 %v820
    %959 = vmatpush.msra.mxu0 %v816
    %960 = vmatpush.msra.mxu0 %v812
    %961 = vmatpush.msra.mxu0 %v808
    %962 = vmatpush.msra.mxu0 %v804
    %963 = vmatmul.f32.gmra.mxu0 %v607
    %v964 = vpop.f32.mrf.mxu0
    %v965 = vadd.f32 %v942, %v964
    %966 = vmatmul.f32.gmra.mxu0 %v611
    %v967 = vpop.f32.mrf.mxu0
    %v968 = vadd.f32 %v945, %v967
    %969 = vdwg.mxu0
    %970 = vmatpush.msra.mxu0 %v673
    %971 = vmatpush.msra.mxu0 %v669
    %972 = vmatpush.msra.mxu0 %v665
    %973 = vmatpush.msra.mxu0 %v661
    %974 = vmatpush.msra.mxu0 %v657
    %975 = vmatpush.msra.mxu0 %v653
    %976 = vmatpush.msra.mxu0 %v649
    %977 = vmatpush.msra.mxu0 %v645
    %978 = vmatpush.msra.mxu0 %v641
    %979 = vmatpush.msra.mxu0 %v637
    %980 = vmatpush.msra.mxu0 %v633
    %981 = vmatpush.msra.mxu0 %v629
    %982 = vmatpush.msra.mxu0 %v625
    %983 = vmatpush.msra.mxu0 %v621
    %984 = vmatpush.msra.mxu0 %v617
    %985 = vmatpush.msra.mxu0 %v613
    %986 = vmatmul.f32.gmra.mxu0 %v604
    %v987 = vpop.f32.mrf.mxu0
    %v988 = vadd.f32 %v871, %v987
    %989 = vmatmul.f32.gmra.mxu0 %v608
    %v990 = vpop.f32.mrf.mxu0
    %v991 = vadd.f32 %v871, %v990
    %992 = vdwg.mxu0
    %993 = vmatpush.msra.mxu0 %v737
    %994 = vmatpush.msra.mxu0 %v733
    %995 = vmatpush.msra.mxu0 %v729
    %996 = vmatpush.msra.mxu0 %v725
    %997 = vmatpush.msra.mxu0 %v721
    %998 = vmatpush.msra.mxu0 %v717
    %999 = vmatpush.msra.mxu0 %v713
    %1000 = vmatpush.msra.mxu0 %v709
    %1001 = vmatpush.msra.mxu0 %v705
    %1002 = vmatpush.msra.mxu0 %v701
    %1003 = vmatpush.msra.mxu0 %v697
    %1004 = vmatpush.msra.mxu0 %v693
    %1005 = vmatpush.msra.mxu0 %v689
    %1006 = vmatpush.msra.mxu0 %v685
    %1007 = vmatpush.msra.mxu0 %v681
    %1008 = vmatpush.msra.mxu0 %v677
    %1009 = vmatmul.f32.gmra.mxu0 %v605
    %v1010 = vpop.f32.mrf.mxu0
    %v1011 = vadd.f32 %v988, %v1010
    %1012 = vmatmul.f32.gmra.mxu0 %v609
    %v1013 = vpop.f32.mrf.mxu0
    %v1014 = vadd.f32 %v991, %v1013
    %1015 = vdwg.mxu0
    %1016 = vmatpush.msra.mxu0 %v801
    %1017 = vmatpush.msra.mxu0 %v797
    %1018 = vmatpush.msra.mxu0 %v793
    %1019 = vmatpush.msra.mxu0 %v789
    %1020 = vmatpush.msra.mxu0 %v785
    %1021 = vmatpush.msra.mxu0 %v781
    %1022 = vmatpush.msra.mxu0 %v777
    %1023 = vmatpush.msra.mxu0 %v773
    %1024 = vmatpush.msra.mxu0 %v769
    %1025 = vmatpush.msra.mxu0 %v765
    %1026 = vmatpush.msra.mxu0 %v761
    %1027 = vmatpush.msra.mxu0 %v757
    %1028 = vmatpush.msra.mxu0 %v753
    %1029 = vmatpush.msra.mxu0 %v749
    %1030 = vmatpush.msra.mxu0 %v745
    %1031 = vmatpush.msra.mxu0 %v741
    %1032 = vmatmul.f32.gmra.mxu0 %v606
    %v1033 = vpop.f32.mrf.mxu0
    %v1034 = vadd.f32 %v1011, %v1033
    %1035 = vmatmul.f32.gmra.mxu0 %v610
    %v1036 = vpop.f32.mrf.mxu0
    %v1037 = vadd.f32 %v1014, %v1036
    %1038 = vdwg.mxu0
    %1039 = vmatpush.msra.mxu0 %v865
    %1040 = vmatpush.msra.mxu0 %v861
    %1041 = vmatpush.msra.mxu0 %v857
    %1042 = vmatpush.msra.mxu0 %v853
    %1043 = vmatpush.msra.mxu0 %v849
    %1044 = vmatpush.msra.mxu0 %v845
    %1045 = vmatpush.msra.mxu0 %v841
    %1046 = vmatpush.msra.mxu0 %v837
    %1047 = vmatpush.msra.mxu0 %v833
    %1048 = vmatpush.msra.mxu0 %v829
    %1049 = vmatpush.msra.mxu0 %v825
    %1050 = vmatpush.msra.mxu0 %v821
    %1051 = vmatpush.msra.mxu0 %v817
    %1052 = vmatpush.msra.mxu0 %v813
    %1053 = vmatpush.msra.mxu0 %v809
    %1054 = vmatpush.msra.mxu0 %v805
    %1055 = vmatmul.f32.gmra.mxu0 %v607
    %v1056 = vpop.f32.mrf.mxu0
    %v1057 = vadd.f32 %v1034, %v1056
    %1058 = vmatmul.f32.gmra.mxu0 %v611
    %v1059 = vpop.f32.mrf.mxu0
    %v1060 = vadd.f32 %v1037, %v1059
    %1061 = vdwg.mxu0
    %1062 = vmatpush.msra.mxu0 %v674
    %1063 = vmatpush.msra.mxu0 %v670
    %1064 = vmatpush.msra.mxu0 %v666
    %1065 = vmatpush.msra.mxu0 %v662
    %1066 = vmatpush.msra.mxu0 %v658
    %1067 = vmatpush.msra.mxu0 %v654
    %1068 = vmatpush.msra.mxu0 %v650
    %1069 = vmatpush.msra.mxu0 %v646
    %1070 = vmatpush.msra.mxu0 %v642
    %1071 = vmatpush.msra.mxu0 %v638
    %1072 = vmatpush.msra.mxu0 %v634
    %1073 = vmatpush.msra.mxu0 %v630
    %1074 = vmatpush.msra.mxu0 %v626
    %1075 = vmatpush.msra.mxu0 %v622
    %1076 = vmatpush.msra.mxu0 %v618
    %1077 = vmatpush.msra.mxu0 %v614
    %1078 = vmatmul.f32.gmra.mxu0 %v604
    %v1079 = vpop.f32.mrf.mxu0
    %v1080 = vadd.f32 %v872, %v1079
    %1081 = vmatmul.f32.gmra.mxu0 %v608
    %v1082 = vpop.f32.mrf.mxu0
    %v1083 = vadd.f32 %v872, %v1082
    %1084 = vdwg.mxu0
    %1085 = vmatpush.msra.mxu0 %v738
    %1086 = vmatpush.msra.mxu0 %v734
    %1087 = vmatpush.msra.mxu0 %v730
    %1088 = vmatpush.msra.mxu0 %v726
    %1089 = vmatpush.msra.mxu0 %v722
    %1090 = vmatpush.msra.mxu0 %v718
    %1091 = vmatpush.msra.mxu0 %v714
    %1092 = vmatpush.msra.mxu0 %v710
    %1093 = vmatpush.msra.mxu0 %v706
    %1094 = vmatpush.msra.mxu0 %v702
    %1095 = vmatpush.msra.mxu0 %v698
    %1096 = vmatpush.msra.mxu0 %v694
    %1097 = vmatpush.msra.mxu0 %v690
    %1098 = vmatpush.msra.mxu0 %v686
    %1099 = vmatpush.msra.mxu0 %v682
    %1100 = vmatpush.msra.mxu0 %v678
    %1101 = vmatmul.f32.gmra.mxu0 %v605
    %v1102 = vpop.f32.mrf.mxu0
    %v1103 = vadd.f32 %v1080, %v1102
    %1104 = vmatmul.f32.gmra.mxu0 %v609
    %v1105 = vpop.f32.mrf.mxu0
    %v1106 = vadd.f32 %v1083, %v1105
    %1107 = vdwg.mxu0
    %1108 = vmatpush.msra.mxu0 %v802
    %1109 = vmatpush.msra.mxu0 %v798
    %1110 = vmatpush.msra.mxu0 %v794
    %1111 = vmatpush.msra.mxu0 %v790
    %1112 = vmatpush.msra.mxu0 %v786
    %1113 = vmatpush.msra.mxu0 %v782
    %1114 = vmatpush.msra.mxu0 %v778
    %1115 = vmatpush.msra.mxu0 %v774
    %1116 = vmatpush.msra.mxu0 %v770
    %1117 = vmatpush.msra.mxu0 %v766
    %1118 = vmatpush.msra.mxu0 %v762
    %1119 = vmatpush.msra.mxu0 %v758
    %1120 = vmatpush.msra.mxu0 %v754
    %1121 = vmatpush.msra.mxu0 %v750
    %1122 = vmatpush.msra.mxu0 %v746
    %1123 = vmatpush.msra.mxu0 %v742
    %1124 = vmatmul.f32.gmra.mxu0 %v606
    %v1125 = vpop.f32.mrf.mxu0
    %v1126 = vadd.f32 %v1103, %v1125
    %1127 = vmatmul.f32.gmra.mxu0 %v610
    %v1128 = vpop.f32.mrf.mxu0
    %v1129 = vadd.f32 %v1106, %v1128
    %1130 = vdwg.mxu0
    %1131 = vmatpush.msra.mxu0 %v866
    %1132 = vmatpush.msra.mxu0 %v862
    %1133 = vmatpush.msra.mxu0 %v858
    %1134 = vmatpush.msra.mxu0 %v854
    %1135 = vmatpush.msra.mxu0 %v850
    %1136 = vmatpush.msra.mxu0 %v846
    %1137 = vmatpush.msra.mxu0 %v842
    %1138 = vmatpush.msra.mxu0 %v838
    %1139 = vmatpush.msra.mxu0 %v834
    %1140 = vmatpush.msra.mxu0 %v830
    %1141 = vmatpush.msra.mxu0 %v826
    %1142 = vmatpush.msra.mxu0 %v822
    %1143 = vmatpush.msra.mxu0 %v818
    %1144 = vmatpush.msra.mxu0 %v814
    %1145 = vmatpush.msra.mxu0 %v810
    %1146 = vmatpush.msra.mxu0 %v806
    %1147 = vmatmul.f32.gmra.mxu0 %v607
    %v1148 = vpop.f32.mrf.mxu0
    %v1149 = vadd.f32 %v1126, %v1148
    %1150 = vmatmul.f32.gmra.mxu0 %v611
    %v1151 = vpop.f32.mrf.mxu0
    %v1152 = vadd.f32 %v1129, %v1151
    %1153 = vdwg.mxu0
    %1154 = vmatpush.msra.mxu0 %v675
    %1155 = vmatpush.msra.mxu0 %v671
    %1156 = vmatpush.msra.mxu0 %v667
    %1157 = vmatpush.msra.mxu0 %v663
    %1158 = vmatpush.msra.mxu0 %v659
    %1159 = vmatpush.msra.mxu0 %v655
    %1160 = vmatpush.msra.mxu0 %v651
    %1161 = vmatpush.msra.mxu0 %v647
    %1162 = vmatpush.msra.mxu0 %v643
    %1163 = vmatpush.msra.mxu0 %v639
    %1164 = vmatpush.msra.mxu0 %v635
    %1165 = vmatpush.msra.mxu0 %v631
    %1166 = vmatpush.msra.mxu0 %v627
    %1167 = vmatpush.msra.mxu0 %v623
    %1168 = vmatpush.msra.mxu0 %v619
    %1169 = vmatpush.msra.mxu0 %v615
    %1170 = vmatmul.f32.gmra.mxu0 %v604
    %v1171 = vpop.f32.mrf.mxu0
    %v1172 = vadd.f32 %v873, %v1171
    %1173 = vmatmul.f32.gmra.mxu0 %v608
    %v1174 = vpop.f32.mrf.mxu0
    %v1175 = vadd.f32 %v873, %v1174
    %1176 = vdwg.mxu0
    %1177 = vmatpush.msra.mxu0 %v739
    %1178 = vmatpush.msra.mxu0 %v735
    %1179 = vmatpush.msra.mxu0 %v731
    %1180 = vmatpush.msra.mxu0 %v727
    %1181 = vmatpush.msra.mxu0 %v723
    %1182 = vmatpush.msra.mxu0 %v719
    %1183 = vmatpush.msra.mxu0 %v715
    %1184 = vmatpush.msra.mxu0 %v711
    %1185 = vmatpush.msra.mxu0 %v707
    %1186 = vmatpush.msra.mxu0 %v703
    %1187 = vmatpush.msra.mxu0 %v699
    %1188 = vmatpush.msra.mxu0 %v695
    %1189 = vmatpush.msra.mxu0 %v691
    %1190 = vmatpush.msra.mxu0 %v687
    %1191 = vmatpush.msra.mxu0 %v683
    %1192 = vmatpush.msra.mxu0 %v679
    %1193 = vmatmul.f32.gmra.mxu0 %v605
    %v1194 = vpop.f32.mrf.mxu0
    %v1195 = vadd.f32 %v1172, %v1194
    %1196 = vmatmul.f32.gmra.mxu0 %v609
    %v1197 = vpop.f32.mrf.mxu0
    %v1198 = vadd.f32 %v1175, %v1197
    %1199 = vdwg.mxu0
    %1200 = vmatpush.msra.mxu0 %v803
    %1201 = vmatpush.msra.mxu0 %v799
    %1202 = vmatpush.msra.mxu0 %v795
    %1203 = vmatpush.msra.mxu0 %v791
    %1204 = vmatpush.msra.mxu0 %v787
    %1205 = vmatpush.msra.mxu0 %v783
    %1206 = vmatpush.msra.mxu0 %v779
    %1207 = vmatpush.msra.mxu0 %v775
    %1208 = vmatpush.msra.mxu0 %v771
    %1209 = vmatpush.msra.mxu0 %v767
    %1210 = vmatpush.msra.mxu0 %v763
    %1211 = vmatpush.msra.mxu0 %v759
    %1212 = vmatpush.msra.mxu0 %v755
    %1213 = vmatpush.msra.mxu0 %v751
    %1214 = vmatpush.msra.mxu0 %v747
    %1215 = vmatpush.msra.mxu0 %v743
    %1216 = vmatmul.f32.gmra.mxu0 %v606
    %v1217 = vpop.f32.mrf.mxu0
    %v1218 = vadd.f32 %v1195, %v1217
    %1219 = vmatmul.f32.gmra.mxu0 %v610
    %v1220 = vpop.f32.mrf.mxu0
    %v1221 = vadd.f32 %v1198, %v1220
    %1222 = vdwg.mxu0
    %1223 = vmatpush.msra.mxu0 %v867
    %1224 = vmatpush.msra.mxu0 %v863
    %1225 = vmatpush.msra.mxu0 %v859
    %1226 = vmatpush.msra.mxu0 %v855
    %1227 = vmatpush.msra.mxu0 %v851
    %1228 = vmatpush.msra.mxu0 %v847
    %1229 = vmatpush.msra.mxu0 %v843
    %1230 = vmatpush.msra.mxu0 %v839
    %1231 = vmatpush.msra.mxu0 %v835
    %1232 = vmatpush.msra.mxu0 %v831
    %1233 = vmatpush.msra.mxu0 %v827
    %1234 = vmatpush.msra.mxu0 %v823
    %1235 = vmatpush.msra.mxu0 %v819
    %1236 = vmatpush.msra.mxu0 %v815
    %1237 = vmatpush.msra.mxu0 %v811
    %1238 = vmatpush.msra.mxu0 %v807
    %1239 = vmatmul.f32.gmra.mxu0 %v607
    %v1240 = vpop.f32.mrf.mxu0
    %v1241 = vadd.f32 %v1218, %v1240
    %1242 = vmatmul.f32.gmra.mxu0 %v611
    %v1243 = vpop.f32.mrf.mxu0
    %v1244 = vadd.f32 %v1221, %v1243
    %1245 = vdwg.mxu0
    %v1246 = vmul.f32 %v965, 0.5
    %v1247 = vmul.f32 %v1057, 0.5
    %v1248 = vmul.f32 %v1149, 0.5
    %v1249 = vmul.f32 %v1241, 0.5
    %v1250 = vmul.f32 %v968, 0.5
    %v1251 = vmul.f32 %v1060, 0.5
    %v1252 = vmul.f32 %v1152, 0.5
    %v1253 = vmul.f32 %v1244, 0.5
    %v1254 = vmul.f32 %v965, 0.70710677
    %v1255 = vmul.f32 %v1057, 0.70710677
    %v1256 = vmul.f32 %v1149, 0.70710677
    %v1257 = vmul.f32 %v1241, 0.70710677
    %v1258 = vmul.f32 %v968, 0.70710677
    %v1259 = vmul.f32 %v1060, 0.70710677
    %v1260 = vmul.f32 %v1152, 0.70710677
    %v1261 = vmul.f32 %v1244, 0.70710677
    %v1262 = vmul.f32 %v1254, %v1254
    %v1263 = vmin.f32 16.0, %v1262
    %v1264 = vmul.f32 %v1263, 2.1237322e-06
    %v1265 = vadd.f32 %v1264, 0.00028619796
    %v1266 = vmul.f32 %v1263, %v1265
    %v1267 = vadd.f32 %v1266, 0.0036580483
    %v1268 = vmul.f32 %v1263, %v1267
    %v1269 = vadd.f32 %v1268, 0.05243302
    %v1270 = vmul.f32 %v1263, %v1269
    %v1271 = vadd.f32 %v1270, 0.18741608
    %v1272 = vmul.f32 %v1263, %v1271
    %v1273 = vadd.f32 %v1272, 1.1283791
    %v1274 = vmul.f32 %v1254, %v1273
    %v1275 = vmul.f32 %v1263, 3.8918573e-05
    %v1276 = vadd.f32 %v1275, 0.001143296
    %v1277 = vmul.f32 %v1263, %v1276
    %v1278 = vadd.f32 %v1277, 0.014752088
    %v1279 = vmul.f32 %v1263, %v1278
    %v1280 = vadd.f32 %v1279, 0.112945676
    %v1281 = vmul.f32 %v1263, %v1280
    %v1282 = vadd.f32 %v1281, 0.4994258
    %v1283 = vmul.f32 %v1263, %v1282
    %v1284 = vadd.f32 %v1283, 1.0
    %v1285 = vrcp.pop %v1284
    %v1286 = vmul.f32 %v1284, %v1285
    %v1287 = vsub.f32 1.0, %v1286
    %v1288 = vmul.f32 %v1285, %v1287
    %v1289 = vadd.f32 %v1285, %v1288
    %vm1290 = vweird.f32 %v1284
    %vm1291 = vweird.f32 %v1285
    %vm1292 = vmor %vm1290, %vm1291
    %v1293 = vsel %vm1292, %v1285, %v1289
    %v1294 = vand.u32 2147483647, %v1284
    %vm1295 = vcmp.eq.f32.partialorder %v1294, 8.507059e+37
    %v1296 = vand.u32 %v1284, 2147483648
    %v1297 = vor.u32 1.1754944e-38, %v1296
    %v1298 = vsel %vm1295, %v1297, %v1293
    %v1299 = vmul.f32 %v1274, %v1298
    %v1300 = vmin.f32 %v1299, 1.0
    %v1301 = vmax.f32 %v1300, -1.0
    %v1302 = vmul.f32 %v1255, %v1255
    %v1303 = vmin.f32 16.0, %v1302
    %v1304 = vmul.f32 %v1303, 2.1237322e-06
    %v1305 = vadd.f32 %v1304, 0.00028619796
    %v1306 = vmul.f32 %v1303, %v1305
    %v1307 = vadd.f32 %v1306, 0.0036580483
    %v1308 = vmul.f32 %v1303, %v1307
    %v1309 = vadd.f32 %v1308, 0.05243302
    %v1310 = vmul.f32 %v1303, %v1309
    %v1311 = vadd.f32 %v1310, 0.18741608
    %v1312 = vmul.f32 %v1303, %v1311
    %v1313 = vadd.f32 %v1312, 1.1283791
    %v1314 = vmul.f32 %v1255, %v1313
    %v1315 = vmul.f32 %v1303, 3.8918573e-05
    %v1316 = vadd.f32 %v1315, 0.001143296
    %v1317 = vmul.f32 %v1303, %v1316
    %v1318 = vadd.f32 %v1317, 0.014752088
    %v1319 = vmul.f32 %v1303, %v1318
    %v1320 = vadd.f32 %v1319, 0.112945676
    %v1321 = vmul.f32 %v1303, %v1320
    %v1322 = vadd.f32 %v1321, 0.4994258
    %v1323 = vmul.f32 %v1303, %v1322
    %v1324 = vadd.f32 %v1323, 1.0
    %v1325 = vrcp.pop %v1324
    %v1326 = vmul.f32 %v1324, %v1325
    %v1327 = vsub.f32 1.0, %v1326
    %v1328 = vmul.f32 %v1325, %v1327
    %v1329 = vadd.f32 %v1325, %v1328
    %vm1330 = vweird.f32 %v1324
    %vm1331 = vweird.f32 %v1325
    %vm1332 = vmor %vm1330, %vm1331
    %v1333 = vsel %vm1332, %v1325, %v1329
    %v1334 = vand.u32 2147483647, %v1324
    %vm1335 = vcmp.eq.f32.partialorder %v1334, 8.507059e+37
    %v1336 = vand.u32 %v1324, 2147483648
    %v1337 = vor.u32 1.1754944e-38, %v1336
    %v1338 = vsel %vm1335, %v1337, %v1333
    %v1339 = vmul.f32 %v1314, %v1338
    %v1340 = vmin.f32 %v1339, 1.0
    %v1341 = vmax.f32 %v1340, -1.0
    %v1342 = vmul.f32 %v1256, %v1256
    %v1343 = vmin.f32 16.0, %v1342
    %v1344 = vmul.f32 %v1343, 2.1237322e-06
    %v1345 = vadd.f32 %v1344, 0.00028619796
    %v1346 = vmul.f32 %v1343, %v1345
    %v1347 = vadd.f32 %v1346, 0.0036580483
    %v1348 = vmul.f32 %v1343, %v1347
    %v1349 = vadd.f32 %v1348, 0.05243302
    %v1350 = vmul.f32 %v1343, %v1349
    %v1351 = vadd.f32 %v1350, 0.18741608
    %v1352 = vmul.f32 %v1343, %v1351
    %v1353 = vadd.f32 %v1352, 1.1283791
    %v1354 = vmul.f32 %v1256, %v1353
    %v1355 = vmul.f32 %v1343, 3.8918573e-05
    %v1356 = vadd.f32 %v1355, 0.001143296
    %v1357 = vmul.f32 %v1343, %v1356
    %v1358 = vadd.f32 %v1357, 0.014752088
    %v1359 = vmul.f32 %v1343, %v1358
    %v1360 = vadd.f32 %v1359, 0.112945676
    %v1361 = vmul.f32 %v1343, %v1360
    %v1362 = vadd.f32 %v1361, 0.4994258
    %v1363 = vmul.f32 %v1343, %v1362
    %v1364 = vadd.f32 %v1363, 1.0
    %v1365 = vrcp.pop %v1364
    %v1366 = vmul.f32 %v1364, %v1365
    %v1367 = vsub.f32 1.0, %v1366
    %v1368 = vmul.f32 %v1365, %v1367
    %v1369 = vadd.f32 %v1365, %v1368
    %vm1370 = vweird.f32 %v1364
    %vm1371 = vweird.f32 %v1365
    %vm1372 = vmor %vm1370, %vm1371
    %v1373 = vsel %vm1372, %v1365, %v1369
    %v1374 = vand.u32 2147483647, %v1364
    %vm1375 = vcmp.eq.f32.partialorder %v1374, 8.507059e+37
    %v1376 = vand.u32 %v1364, 2147483648
    %v1377 = vor.u32 1.1754944e-38, %v1376
    %v1378 = vsel %vm1375, %v1377, %v1373
    %v1379 = vmul.f32 %v1354, %v1378
    %v1380 = vmin.f32 %v1379, 1.0
    %v1381 = vmax.f32 %v1380, -1.0
    %v1382 = vmul.f32 %v1257, %v1257
    %v1383 = vmin.f32 16.0, %v1382
    %v1384 = vmul.f32 %v1383, 2.1237322e-06
    %v1385 = vadd.f32 %v1384, 0.00028619796
    %v1386 = vmul.f32 %v1383, %v1385
    %v1387 = vadd.f32 %v1386, 0.0036580483
    %v1388 = vmul.f32 %v1383, %v1387
    %v1389 = vadd.f32 %v1388, 0.05243302
    %v1390 = vmul.f32 %v1383, %v1389
    %v1391 = vadd.f32 %v1390, 0.18741608
    %v1392 = vmul.f32 %v1383, %v1391
    %v1393 = vadd.f32 %v1392, 1.1283791
    %v1394 = vmul.f32 %v1257, %v1393
    %v1395 = vmul.f32 %v1383, 3.8918573e-05
    %v1396 = vadd.f32 %v1395, 0.001143296
    %v1397 = vmul.f32 %v1383, %v1396
    %v1398 = vadd.f32 %v1397, 0.014752088
    %v1399 = vmul.f32 %v1383, %v1398
    %v1400 = vadd.f32 %v1399, 0.112945676
    %v1401 = vmul.f32 %v1383, %v1400
    %v1402 = vadd.f32 %v1401, 0.4994258
    %v1403 = vmul.f32 %v1383, %v1402
    %v1404 = vadd.f32 %v1403, 1.0
    %v1405 = vrcp.pop %v1404
    %v1406 = vmul.f32 %v1404, %v1405
    %v1407 = vsub.f32 1.0, %v1406
    %v1408 = vmul.f32 %v1405, %v1407
    %v1409 = vadd.f32 %v1405, %v1408
    %vm1410 = vweird.f32 %v1404
    %vm1411 = vweird.f32 %v1405
    %vm1412 = vmor %vm1410, %vm1411
    %v1413 = vsel %vm1412, %v1405, %v1409
    %v1414 = vand.u32 2147483647, %v1404
    %vm1415 = vcmp.eq.f32.partialorder %v1414, 8.507059e+37
    %v1416 = vand.u32 %v1404, 2147483648
    %v1417 = vor.u32 1.1754944e-38, %v1416
    %v1418 = vsel %vm1415, %v1417, %v1413
    %v1419 = vmul.f32 %v1394, %v1418
    %v1420 = vmin.f32 %v1419, 1.0
    %v1421 = vmax.f32 %v1420, -1.0
    %v1422 = vmul.f32 %v1258, %v1258
    %v1423 = vmin.f32 16.0, %v1422
    %v1424 = vmul.f32 %v1423, 2.1237322e-06
    %v1425 = vadd.f32 %v1424, 0.00028619796
    %v1426 = vmul.f32 %v1423, %v1425
    %v1427 = vadd.f32 %v1426, 0.0036580483
    %v1428 = vmul.f32 %v1423, %v1427
    %v1429 = vadd.f32 %v1428, 0.05243302
    %v1430 = vmul.f32 %v1423, %v1429
    %v1431 = vadd.f32 %v1430, 0.18741608
    %v1432 = vmul.f32 %v1423, %v1431
    %v1433 = vadd.f32 %v1432, 1.1283791
    %v1434 = vmul.f32 %v1258, %v1433
    %v1435 = vmul.f32 %v1423, 3.8918573e-05
    %v1436 = vadd.f32 %v1435, 0.001143296
    %v1437 = vmul.f32 %v1423, %v1436
    %v1438 = vadd.f32 %v1437, 0.014752088
    %v1439 = vmul.f32 %v1423, %v1438
    %v1440 = vadd.f32 %v1439, 0.112945676
    %v1441 = vmul.f32 %v1423, %v1440
    %v1442 = vadd.f32 %v1441, 0.4994258
    %v1443 = vmul.f32 %v1423, %v1442
    %v1444 = vadd.f32 %v1443, 1.0
    %v1445 = vrcp.pop %v1444
    %v1446 = vmul.f32 %v1444, %v1445
    %v1447 = vsub.f32 1.0, %v1446
    %v1448 = vmul.f32 %v1445, %v1447
    %v1449 = vadd.f32 %v1445, %v1448
    %vm1450 = vweird.f32 %v1444
    %vm1451 = vweird.f32 %v1445
    %vm1452 = vmor %vm1450, %vm1451
    %v1453 = vsel %vm1452, %v1445, %v1449
    %v1454 = vand.u32 2147483647, %v1444
    %vm1455 = vcmp.eq.f32.partialorder %v1454, 8.507059e+37
    %v1456 = vand.u32 %v1444, 2147483648
    %v1457 = vor.u32 1.1754944e-38, %v1456
    %v1458 = vsel %vm1455, %v1457, %v1453
    %v1459 = vmul.f32 %v1434, %v1458
    %v1460 = vmin.f32 %v1459, 1.0
    %v1461 = vmax.f32 %v1460, -1.0
    %v1462 = vmul.f32 %v1259, %v1259
    %v1463 = vmin.f32 16.0, %v1462
    %v1464 = vmul.f32 %v1463, 2.1237322e-06
    %v1465 = vadd.f32 %v1464, 0.00028619796
    %v1466 = vmul.f32 %v1463, %v1465
    %v1467 = vadd.f32 %v1466, 0.0036580483
    %v1468 = vmul.f32 %v1463, %v1467
    %v1469 = vadd.f32 %v1468, 0.05243302
    %v1470 = vmul.f32 %v1463, %v1469
    %v1471 = vadd.f32 %v1470, 0.18741608
    %v1472 = vmul.f32 %v1463, %v1471
    %v1473 = vadd.f32 %v1472, 1.1283791
    %v1474 = vmul.f32 %v1259, %v1473
    %v1475 = vmul.f32 %v1463, 3.8918573e-05
    %v1476 = vadd.f32 %v1475, 0.001143296
    %v1477 = vmul.f32 %v1463, %v1476
    %v1478 = vadd.f32 %v1477, 0.014752088
    %v1479 = vmul.f32 %v1463, %v1478
    %v1480 = vadd.f32 %v1479, 0.112945676
    %v1481 = vmul.f32 %v1463, %v1480
    %v1482 = vadd.f32 %v1481, 0.4994258
    %v1483 = vmul.f32 %v1463, %v1482
    %v1484 = vadd.f32 %v1483, 1.0
    %v1485 = vrcp.pop %v1484
    %v1486 = vmul.f32 %v1484, %v1485
    %v1487 = vsub.f32 1.0, %v1486
    %v1488 = vmul.f32 %v1485, %v1487
    %v1489 = vadd.f32 %v1485, %v1488
    %vm1490 = vweird.f32 %v1484
    %vm1491 = vweird.f32 %v1485
    %vm1492 = vmor %vm1490, %vm1491
    %v1493 = vsel %vm1492, %v1485, %v1489
    %v1494 = vand.u32 2147483647, %v1484
    %vm1495 = vcmp.eq.f32.partialorder %v1494, 8.507059e+37
    %v1496 = vand.u32 %v1484, 2147483648
    %v1497 = vor.u32 1.1754944e-38, %v1496
    %v1498 = vsel %vm1495, %v1497, %v1493
    %v1499 = vmul.f32 %v1474, %v1498
    %v1500 = vmin.f32 %v1499, 1.0
    %v1501 = vmax.f32 %v1500, -1.0
    %v1502 = vmul.f32 %v1260, %v1260
    %v1503 = vmin.f32 16.0, %v1502
    %v1504 = vmul.f32 %v1503, 2.1237322e-06
    %v1505 = vadd.f32 %v1504, 0.00028619796
    %v1506 = vmul.f32 %v1503, %v1505
    %v1507 = vadd.f32 %v1506, 0.0036580483
    %v1508 = vmul.f32 %v1503, %v1507
    %v1509 = vadd.f32 %v1508, 0.05243302
    %v1510 = vmul.f32 %v1503, %v1509
    %v1511 = vadd.f32 %v1510, 0.18741608
    %v1512 = vmul.f32 %v1503, %v1511
    %v1513 = vadd.f32 %v1512, 1.1283791
    %v1514 = vmul.f32 %v1260, %v1513
    %v1515 = vmul.f32 %v1503, 3.8918573e-05
    %v1516 = vadd.f32 %v1515, 0.001143296
    %v1517 = vmul.f32 %v1503, %v1516
    %v1518 = vadd.f32 %v1517, 0.014752088
    %v1519 = vmul.f32 %v1503, %v1518
    %v1520 = vadd.f32 %v1519, 0.112945676
    %v1521 = vmul.f32 %v1503, %v1520
    %v1522 = vadd.f32 %v1521, 0.4994258
    %v1523 = vmul.f32 %v1503, %v1522
    %v1524 = vadd.f32 %v1523, 1.0
    %v1525 = vrcp.pop %v1524
    %v1526 = vmul.f32 %v1524, %v1525
    %v1527 = vsub.f32 1.0, %v1526
    %v1528 = vmul.f32 %v1525, %v1527
    %v1529 = vadd.f32 %v1525, %v1528
    %vm1530 = vweird.f32 %v1524
    %vm1531 = vweird.f32 %v1525
    %vm1532 = vmor %vm1530, %vm1531
    %v1533 = vsel %vm1532, %v1525, %v1529
    %v1534 = vand.u32 2147483647, %v1524
    %vm1535 = vcmp.eq.f32.partialorder %v1534, 8.507059e+37
    %v1536 = vand.u32 %v1524, 2147483648
    %v1537 = vor.u32 1.1754944e-38, %v1536
    %v1538 = vsel %vm1535, %v1537, %v1533
    %v1539 = vmul.f32 %v1514, %v1538
    %v1540 = vmin.f32 %v1539, 1.0
    %v1541 = vmax.f32 %v1540, -1.0
    %v1542 = vmul.f32 %v1261, %v1261
    %v1543 = vmin.f32 16.0, %v1542
    %v1544 = vmul.f32 %v1543, 2.1237322e-06
    %v1545 = vadd.f32 %v1544, 0.00028619796
    %v1546 = vmul.f32 %v1543, %v1545
    %v1547 = vadd.f32 %v1546, 0.0036580483
    %v1548 = vmul.f32 %v1543, %v1547
    %v1549 = vadd.f32 %v1548, 0.05243302
    %v1550 = vmul.f32 %v1543, %v1549
    %v1551 = vadd.f32 %v1550, 0.18741608
    %v1552 = vmul.f32 %v1543, %v1551
    %v1553 = vadd.f32 %v1552, 1.1283791
    %v1554 = vmul.f32 %v1261, %v1553
    %v1555 = vmul.f32 %v1543, 3.8918573e-05
    %v1556 = vadd.f32 %v1555, 0.001143296
    %v1557 = vmul.f32 %v1543, %v1556
    %v1558 = vadd.f32 %v1557, 0.014752088
    %v1559 = vmul.f32 %v1543, %v1558
    %v1560 = vadd.f32 %v1559, 0.112945676
    %v1561 = vmul.f32 %v1543, %v1560
    %v1562 = vadd.f32 %v1561, 0.4994258
    %v1563 = vmul.f32 %v1543, %v1562
    %v1564 = vadd.f32 %v1563, 1.0
    %v1565 = vrcp.pop %v1564
    %v1566 = vmul.f32 %v1564, %v1565
    %v1567 = vsub.f32 1.0, %v1566
    %v1568 = vmul.f32 %v1565, %v1567
    %v1569 = vadd.f32 %v1565, %v1568
    %vm1570 = vweird.f32 %v1564
    %vm1571 = vweird.f32 %v1565
    %vm1572 = vmor %vm1570, %vm1571
    %v1573 = vsel %vm1572, %v1565, %v1569
    %v1574 = vand.u32 2147483647, %v1564
    %vm1575 = vcmp.eq.f32.partialorder %v1574, 8.507059e+37
    %v1576 = vand.u32 %v1564, 2147483648
    %v1577 = vor.u32 1.1754944e-38, %v1576
    %v1578 = vsel %vm1575, %v1577, %v1573
    %v1579 = vmul.f32 %v1554, %v1578
    %v1580 = vmin.f32 %v1579, 1.0
    %v1581 = vmax.f32 %v1580, -1.0
    %v1582 = vadd.f32 %v1301, 1.0
    %v1583 = vadd.f32 %v1341, 1.0
    %v1584 = vadd.f32 %v1381, 1.0
    %v1585 = vadd.f32 %v1421, 1.0
    %v1586 = vadd.f32 %v1461, 1.0
    %v1587 = vadd.f32 %v1501, 1.0
    %v1588 = vadd.f32 %v1541, 1.0
    %v1589 = vadd.f32 %v1581, 1.0
    %v1590 = vmul.f32 %v1246, %v1582
    %v1591 = vmul.f32 %v1247, %v1583
    %v1592 = vmul.f32 %v1248, %v1584
    %v1593 = vmul.f32 %v1249, %v1585
    %v1594 = vmul.f32 %v1250, %v1586
    %v1595 = vmul.f32 %v1251, %v1587
    %v1596 = vmul.f32 %v1252, %v1588
    %v1597 = vmul.f32 %v1253, %v1589
    %v1598 = vld [vmem:[#allocation11] sm:$0xff]
    %v1599 = vld [vmem:[#allocation11 + $0x8] sm:$0xff]
    %v1600 = vld [vmem:[#allocation11 + $0x10] sm:$0xff]
    %v1601 = vld [vmem:[#allocation11 + $0x18] sm:$0xff]
    %v1602 = vld [vmem:[#allocation11 + $0x20] sm:$0xff]
    %v1603 = vld [vmem:[#allocation11 + $0x28] sm:$0xff]
    %v1604 = vld [vmem:[#allocation11 + $0x30] sm:$0xff]
    %v1605 = vld [vmem:[#allocation11 + $0x38] sm:$0xff]
    %v1606 = vld [vmem:[#allocation11 + $0x40] sm:$0xff]
    %v1607 = vld [vmem:[#allocation11 + $0x48] sm:$0xff]
    %v1608 = vld [vmem:[#allocation11 + $0x50] sm:$0xff]
    %v1609 = vld [vmem:[#allocation11 + $0x58] sm:$0xff]
    %v1610 = vld [vmem:[#allocation11 + $0x60] sm:$0xff]
    %v1611 = vld [vmem:[#allocation11 + $0x68] sm:$0xff]
    %v1612 = vld [vmem:[#allocation11 + $0x70] sm:$0xff]
    %v1613 = vld [vmem:[#allocation11 + $0x78] sm:$0xff]
    %v1614 = vld [vmem:[#allocation11 + $0x80] sm:$0xff]
    %v1615 = vld [vmem:[#allocation11 + $0x88] sm:$0xff]
    %v1616 = vld [vmem:[#allocation11 + $0x90] sm:$0xff]
    %v1617 = vld [vmem:[#allocation11 + $0x98] sm:$0xff]
    %v1618 = vld [vmem:[#allocation11 + $0xa0] sm:$0xff]
    %v1619 = vld [vmem:[#allocation11 + $0xa8] sm:$0xff]
    %v1620 = vld [vmem:[#allocation11 + $0xb0] sm:$0xff]
    %v1621 = vld [vmem:[#allocation11 + $0xb8] sm:$0xff]
    %v1622 = vld [vmem:[#allocation11 + $0xc0] sm:$0xff]
    %v1623 = vld [vmem:[#allocation11 + $0xc8] sm:$0xff]
    %v1624 = vld [vmem:[#allocation11 + $0xd0] sm:$0xff]
    %v1625 = vld [vmem:[#allocation11 + $0xd8] sm:$0xff]
    %v1626 = vld [vmem:[#allocation11 + $0xe0] sm:$0xff]
    %v1627 = vld [vmem:[#allocation11 + $0xe8] sm:$0xff]
    %v1628 = vld [vmem:[#allocation11 + $0xf0] sm:$0xff]
    %v1629 = vld [vmem:[#allocation11 + $0xf8] sm:$0xff]
    %v1630 = vld [vmem:[#allocation11 + $0x100] sm:$0xff]
    %v1631 = vld [vmem:[#allocation11 + $0x108] sm:$0xff]
    %v1632 = vld [vmem:[#allocation11 + $0x110] sm:$0xff]
    %v1633 = vld [vmem:[#allocation11 + $0x118] sm:$0xff]
    %v1634 = vld [vmem:[#allocation11 + $0x120] sm:$0xff]
    %v1635 = vld [vmem:[#allocation11 + $0x128] sm:$0xff]
    %v1636 = vld [vmem:[#allocation11 + $0x130] sm:$0xff]
    %v1637 = vld [vmem:[#allocation11 + $0x138] sm:$0xff]
    %v1638 = vld [vmem:[#allocation11 + $0x140] sm:$0xff]
    %v1639 = vld [vmem:[#allocation11 + $0x148] sm:$0xff]
    %v1640 = vld [vmem:[#allocation11 + $0x150] sm:$0xff]
    %v1641 = vld [vmem:[#allocation11 + $0x158] sm:$0xff]
    %v1642 = vld [vmem:[#allocation11 + $0x160] sm:$0xff]
    %v1643 = vld [vmem:[#allocation11 + $0x168] sm:$0xff]
    %v1644 = vld [vmem:[#allocation11 + $0x170] sm:$0xff]
    %v1645 = vld [vmem:[#allocation11 + $0x178] sm:$0xff]
    %v1646 = vld [vmem:[#allocation11 + $0x180] sm:$0xff]
    %v1647 = vld [vmem:[#allocation11 + $0x188] sm:$0xff]
    %v1648 = vld [vmem:[#allocation11 + $0x190] sm:$0xff]
    %v1649 = vld [vmem:[#allocation11 + $0x198] sm:$0xff]
    %v1650 = vld [vmem:[#allocation11 + $0x1a0] sm:$0xff]
    %v1651 = vld [vmem:[#allocation11 + $0x1a8] sm:$0xff]
    %v1652 = vld [vmem:[#allocation11 + $0x1b0] sm:$0xff]
    %v1653 = vld [vmem:[#allocation11 + $0x1b8] sm:$0xff]
    %v1654 = vld [vmem:[#allocation11 + $0x1c0] sm:$0xff]
    %v1655 = vld [vmem:[#allocation11 + $0x1c8] sm:$0xff]
    %v1656 = vld [vmem:[#allocation11 + $0x1d0] sm:$0xff]
    %v1657 = vld [vmem:[#allocation11 + $0x1d8] sm:$0xff]
    %v1658 = vld [vmem:[#allocation11 + $0x1e0] sm:$0xff]
    %v1659 = vld [vmem:[#allocation11 + $0x1e8] sm:$0xff]
    %v1660 = vld [vmem:[#allocation11 + $0x1f0] sm:$0xff]
    %v1661 = vld [vmem:[#allocation11 + $0x1f8] sm:$0xff]
    %v1662 = vld [vmem:[%s6] sm:$0x1]
    %v1664 = vperm.slane %v1662, 0
    %1666 = vmatpush.msra.mxu0 %v1613
    %1667 = vmatpush.msra.mxu0 %v1612
    %1668 = vmatpush.msra.mxu0 %v1611
    %1669 = vmatpush.msra.mxu0 %v1610
    %1670 = vmatpush.msra.mxu0 %v1609
    %1671 = vmatpush.msra.mxu0 %v1608
    %1672 = vmatpush.msra.mxu0 %v1607
    %1673 = vmatpush.msra.mxu0 %v1606
    %1674 = vmatpush.msra.mxu0 %v1605
    %1675 = vmatpush.msra.mxu0 %v1604
    %1676 = vmatpush.msra.mxu0 %v1603
    %1677 = vmatpush.msra.mxu0 %v1602
    %1678 = vmatpush.msra.mxu0 %v1601
    %1679 = vmatpush.msra.mxu0 %v1600
    %1680 = vmatpush.msra.mxu0 %v1599
    %1681 = vmatpush.msra.mxu0 %v1598
    %1682 = vmatmul.f32.gmra.mxu0 %v1590
    %v1683 = vpop.f32.mrf.mxu0
    %v1684 = vadd.f32 %v1664, %v1683
    %1685 = vmatmul.f32.gmra.mxu0 %v1594
    %v1686 = vpop.f32.mrf.mxu0
    %v1687 = vadd.f32 %v1664, %v1686
    %1688 = vdwg.mxu0
    %1689 = vmatpush.msra.mxu0 %v1629
    %1690 = vmatpush.msra.mxu0 %v1628
    %1691 = vmatpush.msra.mxu0 %v1627
    %1692 = vmatpush.msra.mxu0 %v1626
    %1693 = vmatpush.msra.mxu0 %v1625
    %1694 = vmatpush.msra.mxu0 %v1624
    %1695 = vmatpush.msra.mxu0 %v1623
    %1696 = vmatpush.msra.mxu0 %v1622
    %1697 = vmatpush.msra.mxu0 %v1621
    %1698 = vmatpush.msra.mxu0 %v1620
    %1699 = vmatpush.msra.mxu0 %v1619
    %1700 = vmatpush.msra.mxu0 %v1618
    %1701 = vmatpush.msra.mxu0 %v1617
    %1702 = vmatpush.msra.mxu0 %v1616
    %1703 = vmatpush.msra.mxu0 %v1615
    %1704 = vmatpush.msra.mxu0 %v1614
    %1705 = vmatmul.f32.gmra.mxu0 %v1591
    %v1706 = vpop.f32.mrf.mxu0
    %v1707 = vadd.f32 %v1684, %v1706
    %1708 = vmatmul.f32.gmra.mxu0 %v1595
    %v1709 = vpop.f32.mrf.mxu0
    %v1710 = vadd.f32 %v1687, %v1709
    %1711 = vdwg.mxu0
    %1712 = vmatpush.msra.mxu0 %v1645
    %1713 = vmatpush.msra.mxu0 %v1644
    %1714 = vmatpush.msra.mxu0 %v1643
    %1715 = vmatpush.msra.mxu0 %v1642
    %1716 = vmatpush.msra.mxu0 %v1641
    %1717 = vmatpush.msra.mxu0 %v1640
    %1718 = vmatpush.msra.mxu0 %v1639
    %1719 = vmatpush.msra.mxu0 %v1638
    %1720 = vmatpush.msra.mxu0 %v1637
    %1721 = vmatpush.msra.mxu0 %v1636
    %1722 = vmatpush.msra.mxu0 %v1635
    %1723 = vmatpush.msra.mxu0 %v1634
    %1724 = vmatpush.msra.mxu0 %v1633
    %1725 = vmatpush.msra.mxu0 %v1632
    %1726 = vmatpush.msra.mxu0 %v1631
    %1727 = vmatpush.msra.mxu0 %v1630
    %1728 = vmatmul.f32.gmra.mxu0 %v1592
    %v1729 = vpop.f32.mrf.mxu0
    %v1730 = vadd.f32 %v1707, %v1729
    %1731 = vmatmul.f32.gmra.mxu0 %v1596
    %v1732 = vpop.f32.mrf.mxu0
    %v1733 = vadd.f32 %v1710, %v1732
    %1734 = vdwg.mxu0
    %1735 = vmatpush.msra.mxu0 %v1661
    %1736 = vmatpush.msra.mxu0 %v1660
    %1737 = vmatpush.msra.mxu0 %v1659
    %1738 = vmatpush.msra.mxu0 %v1658
    %1739 = vmatpush.msra.mxu0 %v1657
    %1740 = vmatpush.msra.mxu0 %v1656
    %1741 = vmatpush.msra.mxu0 %v1655
    %1742 = vmatpush.msra.mxu0 %v1654
    %1743 = vmatpush.msra.mxu0 %v1653
    %1744 = vmatpush.msra.mxu0 %v1652
    %1745 = vmatpush.msra.mxu0 %v1651
    %1746 = vmatpush.msra.mxu0 %v1650
    %1747 = vmatpush.msra.mxu0 %v1649
    %1748 = vmatpush.msra.mxu0 %v1648
    %1749 = vmatpush.msra.mxu0 %v1647
    %1750 = vmatpush.msra.mxu0 %v1646
    %1751 = vmatmul.f32.gmra.mxu0 %v1593
    %v1752 = vpop.f32.mrf.mxu0
    %v1753 = vadd.f32 %v1730, %v1752
    %1754 = vmatmul.f32.gmra.mxu0 %v1597
    %v1755 = vpop.f32.mrf.mxu0
    %v1756 = vadd.f32 %v1733, %v1755
    %1757 = vdwg.mxu0
    %v1758 = vmul.f32 %v1753, %v1753
    %v1759 = vmul.f32 %v1756, %v1756
    %1760 = vadd.xlane.f32.xlu0 %v1758
    %v1761 = vpop.xlane.xlu0 %1760
    %1762 = vadd.xlane.f32.xlu0 %v1759
    %v1763 = vpop.xlane.xlu0 %1762
    %v1764 = vmax.f32 %v1761, 1e-24
    %v1765 = vmax.f32 %v1763, 1e-24
    %v1766 = vrsqrt.pop %v1764
    %v1767 = vmul.f32 %v1766, %v1764
    %v1768 = vmul.f32 %v1767, %v1766
    %v1769 = vmul.f32 0.5, %v1768
    %v1770 = vsub.f32 1.5, %v1769
    %v1771 = vmul.f32 %v1766, %v1770
    %vm1772 = vweird.f32 %v1764
    %vm1773 = vweird.f32 %v1766
    %vm1774 = vmor %vm1772, %vm1773
    %v1775 = vsel %vm1774, %v1766, %v1771
    %v1776 = vrsqrt.pop %v1765
    %v1777 = vmul.f32 %v1776, %v1765
    %v1778 = vmul.f32 %v1777, %v1776
    %v1779 = vmul.f32 0.5, %v1778
    %v1780 = vsub.f32 1.5, %v1779
    %v1781 = vmul.f32 %v1776, %v1780
    %vm1782 = vweird.f32 %v1765
    %vm1783 = vweird.f32 %v1776
    %vm1784 = vmor %vm1782, %vm1783
    %v1785 = vsel %vm1784, %v1776, %v1781
    %v1786 = vmul.f32 %v1753, %v1775
    %v1787 = vmul.f32 %v1756, %v1785
    %1788 = vst [vmem:[#allocation13] sm:$0xff] %v1786
    %1789 = vst [vmem:[#allocation13 + $0x8] sm:$0xff] %v1787
    // Predicated region
    $region54: #{tpu_custom_call.1} parent=1 // pred_check
      _
    $region55: #{tpu_custom_call.1} parent=1 // pred_check_branch
      %1791 = sbr.rel (0) target = $region57
    $region56: #{tpu_custom_call.1} parent=1 // pred_region
      %1793 = vsyncadd [#allocation4], 0
      %s1794 = sshll.u32 [#allocation13], 4
      %s1795 = int_to_ptr.vmem [resolvable:$true] %s1794
      %s1796 = sshll.u32 %s7, 4
      %s1797 = int_to_ptr.hbm [resolvable:$true] %s1796
      %1802 = dma.vmem_to_hbm [thread:$0]  %s1795, 256, %s1797, [#allocation4], 128, 128, 8
    $region57: #{tpu_custom_call.1} parent=1 // pred_fallthru
      _
    // Predicated region
    $region58: #{tpu_custom_call.1} parent=1 // pred_check
      _
    $region59: #{tpu_custom_call.1} parent=1 // pred_check_branch
      %1804 = sbr.rel (0) target = $region61
    $region60: #{tpu_custom_call.1} parent=1 // pred_region
      %1806 = dma.done [#allocation4], 256
    $region61: #{tpu_custom_call.1} parent=1 // pred_fallthru
      _
    %1807 = vsyncpa [#allocation3], 1
    %1808 = vsyncpa [#allocation6], 1
    %1809 = vsyncpa [#allocation9], 1
    %1810 = vsyncpa [#allocation12], 1
    %1811 = vsyncpa [#allocation4], 1

</llo_original>
